<compile_context>
chip_gen: v7x
topology: tpu7x:2x2x1
jax: 0.10.0
libtpu: 0.0.40
codegen_flags: <defaults>
</compile_context>

<pallas_src>
import functools

import jax
import jax.numpy as jnp
from jax import lax
from jax.experimental import pallas as pl
from jax.experimental.pallas import tpu as pltpu


_VMEM_LIMIT = 32 * 1024 * 1024   # fits v5e/v6e scoped VMEM and v7x's 64 MiB


def _pick_tile_m(hw, width, target=1024):
    """Conv row tile: multiple of `width`, divides `hw`, roughly `target` rows."""
    tile = min(hw, max(width, (target // width) * width))
    while hw % tile:
        tile -= width
    if tile % 8 and tile != hw:      # keep the output block (8,128)-friendly
        tile = hw
    return tile


def _pick_tile_hw(hw, target=2048):
    """Gram streaming tile: largest multiple of 8 dividing hw and <= target."""
    if hw <= target:
        return hw
    t = min(target, hw)
    t -= t % 8
    while t >= 8:
        if hw % t == 0:
            return t
        t -= 8
    return hw


# ----------------------------- conv (+bias) kernel ---------------------------

def _conv3x3_bias_kernel(xpad_ref, w_ref, b_ref, o_ref, patch_ref, *,
                         tile_m, width, cin, cout):
    """One (batch, row-tile) step of a 3x3 'same' conv on flat channels-last data.

    xpad_ref:  (1, H*W + 2W + 2, Cin)  zero-padded flat image for this batch
    w_ref:     (9*Cin, Cout)           taps flattened in (kh, kw, ci) order
    b_ref:     (1, Cout)
    o_ref:     (1, tile_m, Cout)
    patch_ref: (tile_m, 9*Cin) VMEM scratch — im2col tile for one fat matmul
    """
    t = pl.program_id(1)
    m0 = t * tile_m
    if tile_m % 8 == 0:
        m0 = pl.multiple_of(m0, 8)
    win = tile_m + 2 * width + 2
    # One aligned dynamic window load; the 9 tap windows are static sub-slices.
    window = xpad_ref[0, pl.ds(m0, win), :]          # (win, Cin)

    # Hoisted full-width boundary masks (computed once per tile, reused for all
    # six kw-shifted taps).  Output column of row m is m % width — independent
    # of m0 because tile_m % width == 0.  Width-boundary taps wrap into the
    # neighbouring image row and must be zeroed ('same' padding).
    col = lax.broadcasted_iota(jnp.int32, (tile_m, cin), 0) % width
    not_first_col = col != 0                         # mask for kw == 0 taps
    not_last_col = col != (width - 1)                # mask for kw == 2 taps

    # Assemble the (tile_m, 9*Cin) patch so the 9 taps become a single MXU
    # contraction of depth 9*Cin instead of 9 depth-Cin matmuls.
    for kh in range(3):
        for kw in range(3):
            k = kh * 3 + kw
            off = kh * width + kw    # output row m reads padded row m + off
            a = window[off:off + tile_m, :]
            if kw == 0:
                a = jnp.where(not_first_col, a, 0.0)
            elif kw == 2:
                a = jnp.where(not_last_col, a, 0.0)
            patch_ref[:, k * cin:(k + 1) * cin] = a

    acc = jnp.dot(patch_ref[...], w_ref[...], preferred_element_type=jnp.float32)
    o_ref[0] = acc + b_ref[...]


def conv2d_3x3_same_flat(x_flat, weight, bias, *, width):
    """3x3 'same' conv on flat channels-last activations.

    x_flat: (N, H*W, Cin) f32; weight: (Cout, Cin, 3, 3) (PyTorch layout);
    bias: (Cout,).  Returns (N, H*W, Cout) f32.
    """
    n, hw, cin = x_flat.shape
    cout = weight.shape[0]
    # Pad W+1 zero rows before/after each image: for output row m and tap
    # (kh, kw) the needed input is padded flat row m + kh*W + kw.  H-boundary
    # taps land in the zero pad; W-boundary wrap taps are masked in-kernel.
    xpad = jnp.pad(x_flat, ((0, 0), (width + 1, width + 1), (0, 0)))
    rows = hw + 2 * width + 2
    # (kh, kw, ci) -> flattened contraction axis, matching the patch layout.
    w_flat = jnp.transpose(weight, (2, 3, 1, 0)).reshape(9 * cin, cout)
    b_row = bias.reshape(1, cout)

    tile_m = _pick_tile_m(hw, width)
    grid = (n, hw // tile_m)

    kernel = functools.partial(_conv3x3_bias_kernel,
                               tile_m=tile_m, width=width, cin=cin, cout=cout)
    # TODO(synk): at real VGG sizes, stream only the per-tile halo window via
    # memory_space=pl.ANY + make_async_copy double-buffering instead of keeping
    # the whole padded image resident per batch, and single-buffer the constant
    # weight/bias blocks (pl.Buffered(1)) when pipeline_mode is available here.
    return pl.pallas_call(
        kernel,
        out_shape=jax.ShapeDtypeStruct((n, hw, cout), jnp.float32),
        grid=grid,
        in_specs=[
            pl.BlockSpec((1, rows, cin), lambda i, j: (i, 0, 0)),
            pl.BlockSpec((9 * cin, cout), lambda i, j: (0, 0)),
            pl.BlockSpec((1, cout), lambda i, j: (0, 0)),
        ],
        out_specs=pl.BlockSpec((1, tile_m, cout), lambda i, j: (i, j, 0)),
        scratch_shapes=[pltpu.VMEM((tile_m, 9 * cin), jnp.float32)],
        compiler_params=pltpu.CompilerParams(
            dimension_semantics=("parallel", "parallel"),
            vmem_limit_bytes=_VMEM_LIMIT,
        ),
    )(xpad, w_flat, b_row)


# ----------------------------- Gram / ReLU kernels ---------------------------

def _gram_kernel(f_ref, g_ref, acc_ref, *, n_batch, channels, scale):
    """One (gram-row-block n1, H*W tile) step of G = scale * F F^T.

    f_ref:   (N, tile_hw, C)  streamed activation block (all batches)
    g_ref:   (C, N*C)         gram row-block for batch n1 (written last step)
    acc_ref: (C, N*C) f32     VMEM accumulator
    """
    n1 = pl.program_id(0)
    h = pl.program_id(1)

    @pl.when(h == 0)
    def _():
        acc_ref[...] = jnp.zeros_like(acc_ref)

    f1 = f_ref[n1]                                   # (tile_hw, C)
    for n2 in range(n_batch):
        # TN dot_general contracts the (large) H*W axis, no explicit transpose.
        blk = lax.dot_general(f1, f_ref[n2], (((0,), (0,)), ((), ())),
                              preferred_element_type=jnp.float32)
        acc_ref[:, n2 * channels:(n2 + 1) * channels] += blk

    @pl.when(h == pl.num_programs(1) - 1)
    def _():
        g_ref[...] = acc_ref[...] * scale


def gram_matrix_flat(act_flat):
    """Gram of a flat channels-last activation; equals the PyTorch
    view(N*C, H*W) @ transpose / (N*C*H*W).

    Streams (N, tile_hw, C) blocks over the H*W contraction axis ('arbitrary')
    with a VMEM scratch accumulator; the gram row-block axis is 'parallel'
    (megacore split on v7x)."""
    n, hw, c = act_flat.shape
    scale = 1.0 / float(n * c * hw)
    tile_hw = _pick_tile_hw(hw)
    grid = (n, hw // tile_hw)
    return pl.pallas_call(
        functools.partial(_gram_kernel, n_batch=n, channels=c, scale=scale),
        out_shape=jax.ShapeDtypeStruct((n * c, n * c), jnp.float32),
        grid=grid,
        in_specs=[pl.BlockSpec((n, tile_hw, c), lambda n1, h: (0, h, 0))],
        out_specs=pl.BlockSpec((c, n * c), lambda n1, h: (n1, 0)),
        scratch_shapes=[pltpu.VMEM((c, n * c), jnp.float32)],
        compiler_params=pltpu.CompilerParams(
            dimension_semantics=("parallel", "arbitrary"),
            vmem_limit_bytes=_VMEM_LIMIT,
        ),
    )(act_flat)


def _relu_gram_kernel(f_ref, r_ref, g_ref, acc_ref, *, n_batch, channels, scale):
    """One H*W-tile step of fused ReLU + Gram.

    f_ref:   (N, tile_hw, C)  streamed pre-activation block
    r_ref:   (N, tile_hw, C)  ReLU'd block (cached activation for the next layer)
    g_ref:   (N*C, N*C)       gram output (written on the last step)
    acc_ref: (N*C, N*C) f32   VMEM accumulator
    """
    h = pl.program_id(0)

    @pl.when(h == 0)
    def _():
        acc_ref[...] = jnp.zeros_like(acc_ref)

    rs = []
    for i in range(n_batch):
        r = jnp.maximum(f_ref[i], 0.0)
        r_ref[i] = r
        rs.append(r)
    for n1 in range(n_batch):
        for n2 in range(n_batch):
            blk = lax.dot_general(rs[n1], rs[n2], (((0,), (0,)), ((), ())),
                                  preferred_element_type=jnp.float32)
            acc_ref[n1 * channels:(n1 + 1) * channels,
                    n2 * channels:(n2 + 1) * channels] += blk

    @pl.when(h == pl.num_programs(0) - 1)
    def _():
        g_ref[...] = acc_ref[...] * scale


def relu_and_gram_flat(act_flat):
    """Fused ReLU + Gram: one streamed pass over the activation, returns
    (relu, gram).  The H*W axis is the streamed reduction axis."""
    n, hw, c = act_flat.shape
    scale = 1.0 / float(n * c * hw)
    tile_hw = _pick_tile_hw(hw)
    grid = (hw // tile_hw,)
    # TODO(synk): on v7x, split the gram row-blocks over a leading 'parallel'
    # axis; kept single-core here so the ReLU'd tile is written exactly once.
    return pl.pallas_call(
        functools.partial(_relu_gram_kernel, n_batch=n, channels=c, scale=scale),
        out_shape=(jax.ShapeDtypeStruct((n, hw, c), jnp.float32),
                   jax.ShapeDtypeStruct((n * c, n * c), jnp.float32)),
        grid=grid,
        in_specs=[pl.BlockSpec((n, tile_hw, c), lambda h: (0, h, 0))],
        out_specs=(pl.BlockSpec((n, tile_hw, c), lambda h: (0, h, 0)),
                   pl.BlockSpec((n * c, n * c), lambda h: (0, 0))),
        scratch_shapes=[pltpu.VMEM((n * c, n * c), jnp.float32)],
        compiler_params=pltpu.CompilerParams(
            dimension_semantics=("arbitrary",),
            vmem_limit_bytes=_VMEM_LIMIT,
        ),
    )(act_flat)


# ------------------------------ module equivalent ----------------------------

class VGGActivationsStyle:
    """JAX/Pallas equivalent of VGGActivations_style.

    `layers`: ordered dict name -> ("conv", (w, b)) or ("relu", None), mimicking
    the named children of the wrapped PyTorch model.  Prefix activations are
    cached, so each layer runs exactly once (identical to the O(L^2) re-run in
    the reference, since the prefix is deterministic).
    """

    def __init__(self, layers, target_layers):
        self.layers = layers
        self.target_layers = target_layers
        self.layer_outputs = {}

    def __call__(self, x_nchw):
        n, _, height, width = x_nchw.shape
        # Single NCHW -> flat channels-last (N, H*W, C) transform up front.
        act = jnp.transpose(x_nchw, (0, 2, 3, 1)).reshape(n, height * width, -1)

        self.layer_outputs = {}
        key_name = ""
        applied = set()
        for tgt in self.target_layers:
            found = tgt in self.layers
            if found:
                key_name = tgt if key_name == "" else key_name + f";{tgt}"
            if found and tgt not in applied:
                applied.add(tgt)
                kind, params = self.layers[tgt]
                if kind == "conv":
                    wgt, bias = params
                    act = conv2d_3x3_same_flat(act, wgt, bias, width=width)
                    # TODO(synk): fuse the Gram accumulation into the conv
                    # epilogue (grid over row-tiles with all batches per step)
                    # to avoid re-reading the conv output from HBM.
                    gram = gram_matrix_flat(act)
                elif kind == "relu":
                    act, gram = relu_and_gram_flat(act)
                else:
                    raise ValueError(f"unknown layer kind: {kind}")
            else:
                # Prefix unchanged (missing / duplicate target): Gram of the
                # current activation, as the PyTorch forward would produce.
                gram = gram_matrix_flat(act)
            self.layer_outputs[key_name] = gram
        return self.layer_outputs


# ------------------------------- pure-JAX reference --------------------------

def _reference_grams(x, layers, target_layers):
    def gram(act):
        a, b, c, d = act.shape
        f = act.reshape(a * b, c * d)
        return (f @ f.T) / (a * b * c * d)

    outs = {}
    prefix = []
    key_name = ""
    for tgt in target_layers:
        if tgt in layers:
            key_name = tgt if key_name == "" else key_name + f";{tgt}"
            prefix.append(tgt)
        h = x
        for name in prefix:
            kind, params = layers[name]
            if kind == "conv":
                w, b = params
                h = lax.conv_general_dilated(
                    h, w, (1, 1), "SAME",
                    dimension_numbers=("NCHW", "OIHW", "NCHW"))
                h = h + b[None, :, None, None]
            else:
                h = jnp.maximum(h, 0.0)
        outs[key_name] = gram(h)
    return outs


# ------------------------------------- main -----------------------------------

if __name__ == "__main__":
    key = jax.random.PRNGKey(0)
    k_x, k_w1, k_b1, k_w2, k_b2 = jax.random.split(key, 5)

    N, Cin, H, W = 2, 4, 16, 16
    C1, C2 = 8, 8

    x = jax.random.normal(k_x, (N, Cin, H, W), dtype=jnp.float32)
    w1 = 0.1 * jax.random.normal(k_w1, (C1, Cin, 3, 3), dtype=jnp.float32)
    b1 = 0.1 * jax.random.normal(k_b1, (C1,), dtype=jnp.float32)
    w2 = 0.1 * jax.random.normal(k_w2, (C2, C1, 3, 3), dtype=jnp.float32)
    b2 = 0.1 * jax.random.normal(k_b2, (C2,), dtype=jnp.float32)

    layers = {
        "conv1": ("conv", (w1, b1)),
        "relu1": ("relu", None),
        "conv2": ("conv", (w2, b2)),
        "relu2": ("relu", None),
    }
    target_layers = ["conv1", "relu1", "conv2", "relu2"]

    model = VGGActivationsStyle(layers, target_layers)
    outs = model(x)

    ref = _reference_grams(x, layers, target_layers)
    assert set(outs.keys()) == set(ref.keys())
    for name, gram in outs.items():
        jax.block_until_ready(gram)
        assert gram.shape == ref[name].shape, name
        assert bool(jnp.allclose(gram, ref[name], rtol=1e-2, atol=1e-4)), name

    print("KERNEL_OK")
</pallas_src>

<mosaic_0001>
module attributes {stable_mosaic.version = 11 : i64} {
  func.func @_conv3x3_bias_kernel(%arg0: i32, %arg1: i32, %arg2: memref<1x290x4xf32, #tpu.memory_space<vmem>>, %arg3: memref<36x8xf32, #tpu.memory_space<vmem>>, %arg4: memref<1x8xf32, #tpu.memory_space<vmem>>, %arg5: memref<1x256x8xf32, #tpu.memory_space<vmem>>, %arg6: memref<256x36xf32, #tpu.memory_space<vmem>>) attributes {dimension_semantics = [#tpu.dimension_semantics<parallel>, #tpu.dimension_semantics<parallel>], iteration_bounds = array<i64: 2, 1>, scalar_prefetch = 0 : i64, scratch_operands = 1 : i64, tpu.core_type = #tpu.core_type<tc>, window_params = [{transform_indices = @transform_0, window_bounds = array<i64: 1, 290, 4>}, {pipeline_mode = #tpu.pipeline_mode<synchronous>, transform_indices = @transform_1, window_bounds = array<i64: 36, 8>}, {pipeline_mode = #tpu.pipeline_mode<synchronous>, transform_indices = @transform_2, window_bounds = array<i64: 1, 8>}, {transform_indices = @transform_3, window_bounds = array<i64: 1, 256, 8>}]} {
    %c256_i32 = arith.constant 256 : i32
    %0 = arith.muli %arg1, %c256_i32 : i32
    %1 = tpu.assume_multiple %0, 8 : i32
    %c0 = arith.constant 0 : index
    %2 = arith.index_cast %1 : i32 to index
    %c0_0 = arith.constant 0 : index
    %3 = vector.load %arg2[%c0, %2, %c0_0] : memref<1x290x4xf32, #tpu.memory_space<vmem>>, vector<1x290x4xf32>
    %4 = vector.shape_cast %3 : vector<1x290x4xf32> to vector<290x4xf32>
    %5 = tpu.iota {dimensions = array<i32: 0>} : vector<256x4xi32>
    %c16_i32 = arith.constant 16 : i32
    %c0_i32 = arith.constant 0 : i32
    %6 = arith.cmpi eq, %c16_i32, %c0_i32 : i32
    %c1_i32 = arith.constant 1 : i32
    %7 = arith.select %6, %c1_i32, %c16_i32 : i32
    %8 = vector.broadcast %7 : i32 to vector<256x4xi32>
    %9 = arith.remsi %5, %8 : vector<256x4xi32>
    %c0_i32_1 = arith.constant 0 : i32
    %10 = vector.broadcast %c0_i32_1 : i32 to vector<256x4xi32>
    %11 = arith.cmpi ne, %9, %10 : vector<256x4xi32>
    %c0_i32_2 = arith.constant 0 : i32
    %12 = vector.broadcast %c0_i32_2 : i32 to vector<256x4xi32>
    %13 = arith.cmpi slt, %9, %12 : vector<256x4xi32>
    %c0_i32_3 = arith.constant 0 : i32
    %14 = arith.cmpi slt, %7, %c0_i32_3 : i32
    %15 = vector.broadcast %14 : i1 to vector<256x4xi1>
    %16 = vector.broadcast %15 : vector<256x4xi1> to vector<256x4xi1>
    %17 = arith.xori %13, %16 : vector<256x4xi1>
    %18 = arith.andi %17, %11 : vector<256x4xi1>
    %19 = vector.broadcast %7 : i32 to vector<256x4xi32>
    %20 = arith.addi %9, %19 : vector<256x4xi32>
    %21 = arith.select %18, %20, %9 : vector<256x4xi1>, vector<256x4xi32>
    %c0_i32_4 = arith.constant 0 : i32
    %22 = vector.broadcast %c0_i32_4 : i32 to vector<256x4xi32>
    %23 = arith.cmpi ne, %21, %22 : vector<256x4xi32>
    %c15_i32 = arith.constant 15 : i32
    %24 = vector.broadcast %c15_i32 : i32 to vector<256x4xi32>
    %25 = arith.cmpi ne, %21, %24 : vector<256x4xi32>
    %26 = vector.extract_strided_slice %4 {offsets = [0, 0], sizes = [256, 4], strides = [1, 1]} : vector<290x4xf32> to vector<256x4xf32>
    %cst = arith.constant 0.000000e+00 : f32
    %27 = vector.broadcast %cst : f32 to vector<256x4xf32>
    %28 = arith.select %23, %26, %27 : vector<256x4xi1>, vector<256x4xf32>
    %c0_5 = arith.constant 0 : index
    %c0_6 = arith.constant 0 : index
    %29 = vector.load %arg6[%c0_5, %c0_6] : memref<256x36xf32, #tpu.memory_space<vmem>>, vector<256x4xf32>
    tpu.vector_store %arg6[%c0_5, %c0_6], %28 {strides = array<i32>} : memref<256x36xf32, #tpu.memory_space<vmem>>, vector<256x4xf32>,
    %30 = vector.extract_strided_slice %4 {offsets = [1, 0], sizes = [256, 4], strides = [1, 1]} : vector<290x4xf32> to vector<256x4xf32>
    %c0_7 = arith.constant 0 : index
    %c4 = arith.constant 4 : index
    %31 = vector.load %arg6[%c0_7, %c4] : memref<256x36xf32, #tpu.memory_space<vmem>>, vector<256x4xf32>
    tpu.vector_store %arg6[%c0_7, %c4], %30 {strides = array<i32>} : memref<256x36xf32, #tpu.memory_space<vmem>>, vector<256x4xf32>,
    %32 = vector.extract_strided_slice %4 {offsets = [2, 0], sizes = [256, 4], strides = [1, 1]} : vector<290x4xf32> to vector<256x4xf32>
    %cst_8 = arith.constant 0.000000e+00 : f32
    %33 = vector.broadcast %cst_8 : f32 to vector<256x4xf32>
    %34 = arith.select %25, %32, %33 : vector<256x4xi1>, vector<256x4xf32>
    %c0_9 = arith.constant 0 : index
    %c8 = arith.constant 8 : index
    %35 = vector.load %arg6[%c0_9, %c8] : memref<256x36xf32, #tpu.memory_space<vmem>>, vector<256x4xf32>
    tpu.vector_store %arg6[%c0_9, %c8], %34 {strides = array<i32>} : memref<256x36xf32, #tpu.memory_space<vmem>>, vector<256x4xf32>,
    %36 = vector.extract_strided_slice %4 {offsets = [16, 0], sizes = [256, 4], strides = [1, 1]} : vector<290x4xf32> to vector<256x4xf32>
    %cst_10 = arith.constant 0.000000e+00 : f32
    %37 = vector.broadcast %cst_10 : f32 to vector<256x4xf32>
    %38 = arith.select %23, %36, %37 : vector<256x4xi1>, vector<256x4xf32>
    %c0_11 = arith.constant 0 : index
    %c12 = arith.constant 12 : index
    %39 = vector.load %arg6[%c0_11, %c12] : memref<256x36xf32, #tpu.memory_space<vmem>>, vector<256x4xf32>
    tpu.vector_store %arg6[%c0_11, %c12], %38 {strides = array<i32>} : memref<256x36xf32, #tpu.memory_space<vmem>>, vector<256x4xf32>,
    %40 = vector.extract_strided_slice %4 {offsets = [17, 0], sizes = [256, 4], strides = [1, 1]} : vector<290x4xf32> to vector<256x4xf32>
    %c0_12 = arith.constant 0 : index
    %c16 = arith.constant 16 : index
    %41 = vector.load %arg6[%c0_12, %c16] : memref<256x36xf32, #tpu.memory_space<vmem>>, vector<256x4xf32>
    tpu.vector_store %arg6[%c0_12, %c16], %40 {strides = array<i32>} : memref<256x36xf32, #tpu.memory_space<vmem>>, vector<256x4xf32>,
    %42 = vector.extract_strided_slice %4 {offsets = [18, 0], sizes = [256, 4], strides = [1, 1]} : vector<290x4xf32> to vector<256x4xf32>
    %cst_13 = arith.constant 0.000000e+00 : f32
    %43 = vector.broadcast %cst_13 : f32 to vector<256x4xf32>
    %44 = arith.select %25, %42, %43 : vector<256x4xi1>, vector<256x4xf32>
    %c0_14 = arith.constant 0 : index
    %c20 = arith.constant 20 : index
    %45 = vector.load %arg6[%c0_14, %c20] : memref<256x36xf32, #tpu.memory_space<vmem>>, vector<256x4xf32>
    tpu.vector_store %arg6[%c0_14, %c20], %44 {strides = array<i32>} : memref<256x36xf32, #tpu.memory_space<vmem>>, vector<256x4xf32>,
    %46 = vector.extract_strided_slice %4 {offsets = [32, 0], sizes = [256, 4], strides = [1, 1]} : vector<290x4xf32> to vector<256x4xf32>
    %cst_15 = arith.constant 0.000000e+00 : f32
    %47 = vector.broadcast %cst_15 : f32 to vector<256x4xf32>
    %48 = arith.select %23, %46, %47 : vector<256x4xi1>, vector<256x4xf32>
    %c0_16 = arith.constant 0 : index
    %c24 = arith.constant 24 : index
    %49 = vector.load %arg6[%c0_16, %c24] : memref<256x36xf32, #tpu.memory_space<vmem>>, vector<256x4xf32>
    tpu.vector_store %arg6[%c0_16, %c24], %48 {strides = array<i32>} : memref<256x36xf32, #tpu.memory_space<vmem>>, vector<256x4xf32>,
    %50 = vector.extract_strided_slice %4 {offsets = [33, 0], sizes = [256, 4], strides = [1, 1]} : vector<290x4xf32> to vector<256x4xf32>
    %c0_17 = arith.constant 0 : index
    %c28 = arith.constant 28 : index
    %51 = vector.load %arg6[%c0_17, %c28] : memref<256x36xf32, #tpu.memory_space<vmem>>, vector<256x4xf32>
    tpu.vector_store %arg6[%c0_17, %c28], %50 {strides = array<i32>} : memref<256x36xf32, #tpu.memory_space<vmem>>, vector<256x4xf32>,
    %52 = vector.extract_strided_slice %4 {offsets = [34, 0], sizes = [256, 4], strides = [1, 1]} : vector<290x4xf32> to vector<256x4xf32>
    %cst_18 = arith.constant 0.000000e+00 : f32
    %53 = vector.broadcast %cst_18 : f32 to vector<256x4xf32>
    %54 = arith.select %25, %52, %53 : vector<256x4xi1>, vector<256x4xf32>
    %c0_19 = arith.constant 0 : index
    %c32 = arith.constant 32 : index
    %55 = vector.load %arg6[%c0_19, %c32] : memref<256x36xf32, #tpu.memory_space<vmem>>, vector<256x4xf32>
    tpu.vector_store %arg6[%c0_19, %c32], %54 {strides = array<i32>} : memref<256x36xf32, #tpu.memory_space<vmem>>, vector<256x4xf32>,
    %c0_20 = arith.constant 0 : index
    %c0_21 = arith.constant 0 : index
    %56 = vector.load %arg6[%c0_20, %c0_21] : memref<256x36xf32, #tpu.memory_space<vmem>>, vector<256x36xf32>
    %c0_22 = arith.constant 0 : index
    %c0_23 = arith.constant 0 : index
    %57 = vector.load %arg3[%c0_22, %c0_23] : memref<36x8xf32, #tpu.memory_space<vmem>>, vector<36x8xf32>
    %cst_24 = arith.constant dense<0.000000e+00> : vector<256x8xf32>
    %58 = tpu.matmul %56, %57, %cst_24 {dimension_numbers = #tpu.dot_dimension_numbers<[1], [0], [0], [1], [0, 0, 1, 1], [], []>} : vector<256x36xf32>, vector<36x8xf32>, vector<256x8xf32> -> vector<256x8xf32>
    %c0_25 = arith.constant 0 : index
    %c0_26 = arith.constant 0 : index
    %59 = vector.load %arg4[%c0_25, %c0_26] : memref<1x8xf32, #tpu.memory_space<vmem>>, vector<1x8xf32>
    %60 = vector.broadcast %59 : vector<1x8xf32> to vector<256x8xf32>
    %61 = arith.addf %58, %60 : vector<256x8xf32>
    %c0_27 = arith.constant 0 : index
    %c0_28 = arith.constant 0 : index
    %c0_29 = arith.constant 0 : index
    %62 = vector.load %arg5[%c0_27, %c0_28, %c0_29] : memref<1x256x8xf32, #tpu.memory_space<vmem>>, vector<1x256x8xf32>
    %63 = vector.shape_cast %62 : vector<1x256x8xf32> to vector<256x8xf32>
    %64 = vector.shape_cast %61 : vector<256x8xf32> to vector<1x256x8xf32>
    tpu.vector_store %arg5[%c0_27, %c0_28, %c0_29], %64 {strides = array<i32>} : memref<1x256x8xf32, #tpu.memory_space<vmem>>, vector<1x256x8xf32>,
    return
  }
  func.func @transform_0(%arg0: i32, %arg1: i32) -> (i32, i32, i32) {
    %c0_i32 = arith.constant 0 : i32
    %c0_i32_0 = arith.constant 0 : i32
    %c0_i32_1 = arith.constant 0 : i32
    return %arg0, %c0_i32, %c0_i32_0 : i32, i32, i32
  }
  func.func @transform_1(%arg0: i32, %arg1: i32) -> (i32, i32) {
    %c0_i32 = arith.constant 0 : i32
    %c0_i32_0 = arith.constant 0 : i32
    %c0_i32_1 = arith.constant 0 : i32
    return %c0_i32, %c0_i32_0 : i32, i32
  }
  func.func @transform_2(%arg0: i32, %arg1: i32) -> (i32, i32) {
    %c0_i32 = arith.constant 0 : i32
    %c0_i32_0 = arith.constant 0 : i32
    %c0_i32_1 = arith.constant 0 : i32
    return %c0_i32, %c0_i32_0 : i32, i32
  }
  func.func @transform_3(%arg0: i32, %arg1: i32) -> (i32, i32, i32) {
    %c0_i32 = arith.constant 0 : i32
    %c0_i32_0 = arith.constant 0 : i32
    return %arg0, %arg1, %c0_i32 : i32, i32, i32
  }
}

</mosaic_0001>

<llo_original>
// kernel: tpu_custom_call.1
$region0: #{tpu_custom_call.1}
  #allocation0 [shape = 'u32[]', space=smem, size = 0x4, offset = 0x4, fixed_abs, tag = 'smem constant byte address 0x4 - core index']
  #allocation1 [shape = 'u32[144,128]{1,0:T(1,128)}', space=vmem, size = 0x12000, scoped, tag = 'internal scratch']
  #allocation2 [shape = 'f32[256,36]{1,0:T(8,128)}', space=vmem, size = 0x20000, scoped, tag = 'scratch operand']
  %s0 = inlined_call_operand.vmem [shape: f32[2,290,4], index: 0, kind: input, shape index: {}]
  %s1 = inlined_call_operand.vmem [shape: f32[36,8], index: 1, kind: input, shape index: {}]
  %s2 = inlined_call_operand.vmem [shape: f32[1,8], index: 2, kind: input, shape index: {}]
  %s3 = inlined_call_operand.vmem [shape: f32[2,256,8], index: 3, kind: output, shape index: {}]
  %s4 = sld [smem:[#allocation0]]
  $region45: #{tpu_custom_call.1} parent=0
    _
  %s6 = ssub.s32 1, %s4
  %s7 = scalar_select 0, %s6, %s4
  loop: start=0, step=1, limit=4
  $region2: #{tpu_custom_call.1} parent=0 // loop_pre_header
    _
  $region3: #{tpu_custom_call.1} parent=0 // loop_header
    %s9 = sphi 0, %s13
    %p10 = scmp.ge.s32.totalorder %s9, 4
    %s16 = sphi 0, %s28
    %s17 = sphi 0, %s24
    %s18 = sphi 0, %s16
    %s19 = sphi 0, %s17
    %s20 = sphi 0, %s18
    %s21 = sphi 0, %s19
    %s31 = sphi 0, %s33
    %s34 = sphi 0, %s31
    %s35 = sphi 0, %s34
    %s51 = sphi 0, %s35
    %s55 = sphi 0, %s55
    %s57 = sphi 0, %s55
    %s58 = sphi 0, %s57
    %s72 = sphi 0, %s58
    %s76 = sphi 0, %s76
    %s78 = sphi 0, %s76
    %s79 = sphi 0, %s78
    %s93 = sphi 0, %s79
    %s101 = sphi 0, %s103
    %s104 = sphi 0, %s101
    %s105 = sphi 0, %s104
    %s121 = sphi 0, %s105
  $region4: #{tpu_custom_call.1} parent=0 // loop_header_branch
    %12 = sbr.rel (%p10) target = $region8
  $region5: #{tpu_custom_call.1} parent=0 // loop_body
    %s14 = ssub.s32 %s9, 1
    %s15 = ssub.s32 %s9, 2
    %s22 = sadd.s32 1, %s17
    %p23 = scmp.ge.s32.totalorder %s22, 1
    %s24 = scalar_select %p23, 0, %s22
    %s25 = sadd.s32 1, %s16
    %s26 = scalar_select %p23, %s25, %s16
    %p27 = scmp.ge.s32.totalorder %s26, 2
    %s28 = scalar_select %p27, 0, %s26
    %s29 = ssub.s32 %s16, %s28
    %p30 = scmp.eq.s32.totalorder %s29, 0
    %s32 = sadd.s32 %s31, 1
    %s33 = scalar_select %p30, %s31, %s32
    %p36 = pneg %p30
    %p37 = scmp.eq.s32.totalorder %s9, 1
    %p38 = por %p36, %p37
    %p39 = scmp.ne.s32.totalorder %s31, %s34
    %p40 = scmp.eq.s32.totalorder %s9, 0
    %p41 = por %p39, %p40
    %p42 = scmp.ne.s32.totalorder %s31, %s34
    %p43 = scmp.eq.s32.totalorder %s14, 1
    %p44 = por %p42, %p43
    %p45 = scmp.ne.s32.totalorder %s34, %s35
    %p46 = scmp.eq.s32.totalorder %s14, 0
    %p47 = por %p45, %p46
    %p48 = scmp.ne.s32.totalorder %s34, %s35
    %p49 = scmp.eq.s32.totalorder %s15, 1
    %p50 = por %p48, %p49
    %p52 = scmp.ne.s32.totalorder %s35, %s51
    %p53 = scmp.eq.s32.totalorder %s15, 0
    %p54 = por %p52, %p53
    %s56 = sadd.s32 %s55, 1
    %p59 = scmp.eq.s32.totalorder %s9, 1
    %p60 = scmp.ne.s32.totalorder %s55, %s57
    %p61 = scmp.eq.s32.totalorder %s9, 0
    %p62 = por %p60, %p61
    %p63 = scmp.ne.s32.totalorder %s55, %s57
    %p64 = scmp.eq.s32.totalorder %s14, 1
    %p65 = por %p63, %p64
    %p66 = scmp.ne.s32.totalorder %s57, %s58
    %p67 = scmp.eq.s32.totalorder %s14, 0
    %p68 = por %p66, %p67
    %p69 = scmp.ne.s32.totalorder %s57, %s58
    %p70 = scmp.eq.s32.totalorder %s15, 1
    %p71 = por %p69, %p70
    %p73 = scmp.ne.s32.totalorder %s58, %s72
    %p74 = scmp.eq.s32.totalorder %s15, 0
    %p75 = por %p73, %p74
    %s77 = sadd.s32 %s76, 1
    %p80 = scmp.eq.s32.totalorder %s9, 1
    %p81 = scmp.ne.s32.totalorder %s76, %s78
    %p82 = scmp.eq.s32.totalorder %s9, 0
    %p83 = por %p81, %p82
    %p84 = scmp.ne.s32.totalorder %s76, %s78
    %p85 = scmp.eq.s32.totalorder %s14, 1
    %p86 = por %p84, %p85
    %p87 = scmp.ne.s32.totalorder %s78, %s79
    %p88 = scmp.eq.s32.totalorder %s14, 0
    %p89 = por %p87, %p88
    %p90 = scmp.ne.s32.totalorder %s78, %s79
    %p91 = scmp.eq.s32.totalorder %s15, 1
    %p92 = por %p90, %p91
    %p94 = scmp.ne.s32.totalorder %s79, %s93
    %p95 = scmp.eq.s32.totalorder %s15, 0
    %p96 = por %p94, %p95
    %s97 = ssub.s32 %s16, %s28
    %s98 = ssub.s32 %s17, %s24
    %s99 = sor.u32 %s97, %s98
    %p100 = scmp.eq.s32.totalorder %s99, 0
    %s102 = sadd.s32 %s101, 1
    %s103 = scalar_select %p100, %s101, %s102
    %p106 = pneg %p100
    %p107 = scmp.eq.s32.totalorder %s9, 1
    %p108 = por %p106, %p107
    %p109 = scmp.ne.s32.totalorder %s101, %s104
    %p110 = scmp.eq.s32.totalorder %s9, 0
    %p111 = por %p109, %p110
    %p112 = scmp.ne.s32.totalorder %s101, %s104
    %p113 = scmp.eq.s32.totalorder %s14, 1
    %p114 = por %p112, %p113
    %p115 = scmp.ne.s32.totalorder %s104, %s105
    %p116 = scmp.eq.s32.totalorder %s14, 0
    %p117 = por %p115, %p116
    %p118 = scmp.ne.s32.totalorder %s104, %s105
    %p119 = scmp.eq.s32.totalorder %s15, 1
    %p120 = por %p118, %p119
    %p122 = scmp.ne.s32.totalorder %s105, %s121
    %p123 = scmp.eq.s32.totalorder %s15, 0
    %p124 = por %p122, %p123
    %p125 = scmp.le.s32.totalorder 1, %s9
    %p126 = scmp.lt.s32.totalorder %s9, 3
    %p127 = pnand %p125, %p126
    %p128 = pneg %p127
    // Predicated region
    $region9: #{tpu_custom_call.1} parent=5 // pred_check
      _
    $region10: #{tpu_custom_call.1} parent=5 // pred_check_branch
      %130 = sbr.rel (%p127) target = $region12
    $region11: #{tpu_custom_call.1} parent=5 // pred_region
      %s131 = ssub.s32 %s9, 1
      // Predicated region
      $region13: #{tpu_custom_call.1} parent=11 // pred_check
        %p132 = pneg %p68
      $region14: #{tpu_custom_call.1} parent=11 // pred_check_branch
        %134 = sbr.rel (%p132) target = $region16
      $region15: #{tpu_custom_call.1} parent=11 // pred_region
        _
      $region16: #{tpu_custom_call.1} parent=11 // pred_fallthru
        _
      // Predicated region
      $region17: #{tpu_custom_call.1} parent=11 // pred_check
        %p135 = pneg %p89
      $region18: #{tpu_custom_call.1} parent=11 // pred_check_branch
        %137 = sbr.rel (%p135) target = $region20
      $region19: #{tpu_custom_call.1} parent=11 // pred_region
        _
      $region20: #{tpu_custom_call.1} parent=11 // pred_fallthru
        _
    $region12: #{tpu_custom_call.1} parent=5 // pred_fallthru
      _
    %p138 = scmp.lt.s32.totalorder %s9, 2
    // Predicated region
    $region21: #{tpu_custom_call.1} parent=5 // pred_check
      %p139 = pneg %p138
    $region22: #{tpu_custom_call.1} parent=5 // pred_check_branch
      %141 = sbr.rel (%p139) target = $region24
    $region23: #{tpu_custom_call.1} parent=5 // pred_region
      // Predicated region
      $region25: #{tpu_custom_call.1} parent=23 // pred_check
        %p142 = pneg %p41
      $region26: #{tpu_custom_call.1} parent=23 // pred_check_branch
        %144 = sbr.rel (%p142) target = $region28
      $region27: #{tpu_custom_call.1} parent=23 // pred_region
        %p145 = scmp.lt.s32.totalorder %s16, 1
        %s146 = scalar_select %p145, %s16, 1
        %s147 = smul.addr %s146, 37
        %s148 = smul.addr %s147, 8
        %s149 = scalar_lea.vmem %s0, %s148
      $region28: #{tpu_custom_call.1} parent=23 // pred_fallthru
        _
    $region24: #{tpu_custom_call.1} parent=5 // pred_fallthru
      _
    %p150 = scmp.le.s32.totalorder 1, %s9
    %p151 = scmp.lt.s32.totalorder %s9, 3
    %p152 = pnand %p150, %p151
    %p153 = pneg %p152
    // Predicated region
    $region29: #{tpu_custom_call.1} parent=5 // pred_check
      _
    $region30: #{tpu_custom_call.1} parent=5 // pred_check_branch
      %155 = sbr.rel (%p152) target = $region32
    $region31: #{tpu_custom_call.1} parent=5 // pred_region
      %s156 = ssub.s32 %s9, 1
      %p157 = scmp.lt.s32.totalorder %s18, 1
      %s158 = scalar_select %p157, %s18, 1
      %s159 = smul.addr %s158, 37
      %s160 = smul.addr %s159, 8
      %s161 = scalar_lea.vmem %s0, %s160
      %p162 = pneg %p47
      %p163 = pneg %p44
      %p164 = pneg %p68
      %p165 = pneg %p65
      %p166 = pneg %p89
      %p167 = pneg %p86
      %p168 = pneg %p117
      %p169 = pneg %p114
      %s170 = smul.u32 32, %s19
      %p171 = scmp.lt.s32.totalorder %s18, 1
      %s172 = scalar_select %p171, %s18, 1
      %p173 = scmp.lt.s32.totalorder %s170, 31
      %s174 = scalar_select %p173, %s170, 31
      %s175 = smul.addr %s172, 32
      %s176 = sadd.s32 %s174, %s175
      %s177 = smul.addr %s176, 8
      %s178 = scalar_lea.vmem %s3, %s177
      %p179 = scmp.lt.s32.totalorder %s18, 1
      %s180 = scalar_select %p179, %s18, 1
      %s181 = smul.addr %s180, 37
      %s182 = smul.addr %s181, 8
      %s183 = scalar_lea.vmem %s0, %s182
      %s184 = smul.u32 32, %s19
      %p185 = scmp.lt.s32.totalorder %s18, 1
      %s186 = scalar_select %p185, %s18, 1
      %p187 = scmp.lt.s32.totalorder %s184, 31
      %s188 = scalar_select %p187, %s184, 31
      %s189 = smul.addr %s186, 32
      %s190 = sadd.s32 %s188, %s189
      %s191 = smul.addr %s190, 8
      %s192 = scalar_lea.vmem %s3, %s191
      %s193 = smul.u32 32, %s19
      %s194 = smul.u32 %s19, 256
      %s195 = scalar_lea.vmem %s183, %s194
      %v196 = vld [vmem:[%s195] sm:$0xff]
      %v197 = vld [vmem:[%s195 + $0x8] sm:$0xff]
      %v198 = vld [vmem:[%s195 + $0x10] sm:$0xff]
      %v199 = vld [vmem:[%s195 + $0x18] sm:$0xff]
      %v200 = vld [vmem:[%s195 + $0x20] sm:$0xff]
      %v201 = vld [vmem:[%s195 + $0x28] sm:$0xff]
      %v202 = vld [vmem:[%s195 + $0x30] sm:$0xff]
      %v203 = vld [vmem:[%s195 + $0x38] sm:$0xff]
      %v204 = vld [vmem:[%s195 + $0x40] sm:$0xff]
      %v205 = vld [vmem:[%s195 + $0x48] sm:$0xff]
      %v206 = vld [vmem:[%s195 + $0x50] sm:$0xff]
      %v207 = vld [vmem:[%s195 + $0x58] sm:$0xff]
      %v208 = vld [vmem:[%s195 + $0x60] sm:$0xff]
      %v209 = vld [vmem:[%s195 + $0x68] sm:$0xff]
      %v210 = vld [vmem:[%s195 + $0x70] sm:$0xff]
      %v211 = vld [vmem:[%s195 + $0x78] sm:$0xff]
      %v212 = vld [vmem:[%s195 + $0x80] sm:$0xff]
      %v213 = vld [vmem:[%s195 + $0x88] sm:$0xff]
      %v214 = vld [vmem:[%s195 + $0x90] sm:$0xff]
      %v215 = vld [vmem:[%s195 + $0x98] sm:$0xff]
      %v216 = vld [vmem:[%s195 + $0xa0] sm:$0xff]
      %v217 = vld [vmem:[%s195 + $0xa8] sm:$0xff]
      %v218 = vld [vmem:[%s195 + $0xb0] sm:$0xff]
      %v219 = vld [vmem:[%s195 + $0xb8] sm:$0xff]
      %v220 = vld [vmem:[%s195 + $0xc0] sm:$0xff]
      %v221 = vld [vmem:[%s195 + $0xc8] sm:$0xff]
      %v222 = vld [vmem:[%s195 + $0xd0] sm:$0xff]
      %v223 = vld [vmem:[%s195 + $0xd8] sm:$0xff]
      %v224 = vld [vmem:[%s195 + $0xe0] sm:$0xff]
      %v225 = vld [vmem:[%s195 + $0xe8] sm:$0xff]
      %v226 = vld [vmem:[%s195 + $0xf0] sm:$0xff]
      %v227 = vld [vmem:[%s195 + $0xf8] sm:$0xff]
      %v228 = vld [vmem:[%s195 + $0x100] sm:$0xff]
      %v229 = vld [vmem:[%s195 + $0x108] sm:$0xff]
      %v230 = vld [vmem:[%s195 + $0x110] sm:$0xff]
      %v231 = vld [vmem:[%s195 + $0x118] sm:$0xff]
      %v232 = vld [vmem:[%s195 + $0x120] sm:$0x3]
      %v233 = vlaneseq
      %v234 = vshrl.u32 %v233, 7
      %v235 = vadd.s32 %v234, 8
      %v236 = vadd.s32 %v234, 16
      %v237 = vadd.s32 %v234, 24
      %v238 = vadd.s32 %v234, 32
      %v239 = vadd.s32 %v234, 40
      %v240 = vadd.s32 %v234, 48
      %v241 = vadd.s32 %v234, 56
      %v242 = vadd.s32 %v234, 64
      %v243 = vadd.s32 %v234, 72
      %v244 = vadd.s32 %v234, 80
      %v245 = vadd.s32 %v234, 88
      %v246 = vadd.s32 %v234, 96
      %v247 = vadd.s32 %v234, 104
      %v248 = vadd.s32 %v234, 112
      %v249 = vadd.s32 %v234, 120
      %v250 = vadd.s32 %v234, 128
      %v251 = vadd.s32 %v234, 136
      %v252 = vadd.s32 %v234, 144
      %v253 = vadd.s32 %v234, 152
      %v254 = vadd.s32 %v234, 160
      %v255 = vadd.s32 %v234, 168
      %v256 = vadd.s32 %v234, 176
      %v257 = vadd.s32 %v234, 184
      %v258 = vadd.s32 %v234, 192
      %v259 = vadd.s32 %v234, 200
      %v260 = vadd.s32 %v234, 208
      %v261 = vadd.s32 %v234, 216
      %v262 = vadd.s32 %v234, 224
      %v263 = vadd.s32 %v234, 232
      %v264 = vadd.s32 %v234, 240
      %v265 = vadd.s32 %v234, 248
      %vm266 = vcmp.lt.s32.totalorder %v234, 0
      %v267 = vsub.s32 0, %v234
      %v268 = vsel %vm266, %v267, %v234
      %v269 = vshrl.u32 %v268, 4
      %v270 = vand.u32 %v268, 15
      %v271 = vsub.s32 0, %v270
      %v272 = vsel %vm266, %v271, %v270
      %vm273 = vcmp.lt.s32.totalorder %v235, 0
      %v274 = vsub.s32 0, %v235
      %v275 = vsel %vm273, %v274, %v235
      %v276 = vshrl.u32 %v275, 4
      %v277 = vand.u32 %v275, 15
      %v278 = vsub.s32 0, %v277
      %v279 = vsel %vm273, %v278, %v277
      %vm280 = vcmp.lt.s32.totalorder %v236, 0
      %v281 = vsub.s32 0, %v236
      %v282 = vsel %vm280, %v281, %v236
      %v283 = vshrl.u32 %v282, 4
      %v284 = vand.u32 %v282, 15
      %v285 = vsub.s32 0, %v284
      %v286 = vsel %vm280, %v285, %v284
      %vm287 = vcmp.lt.s32.totalorder %v237, 0
      %v288 = vsub.s32 0, %v237
      %v289 = vsel %vm287, %v288, %v237
      %v290 = vshrl.u32 %v289, 4
      %v291 = vand.u32 %v289, 15
      %v292 = vsub.s32 0, %v291
      %v293 = vsel %vm287, %v292, %v291
      %vm294 = vcmp.lt.s32.totalorder %v238, 0
      %v295 = vsub.s32 0, %v238
      %v296 = vsel %vm294, %v295, %v238
      %v297 = vshrl.u32 %v296, 4
      %v298 = vand.u32 %v296, 15
      %v299 = vsub.s32 0, %v298
      %v300 = vsel %vm294, %v299, %v298
      %vm301 = vcmp.lt.s32.totalorder %v239, 0
      %v302 = vsub.s32 0, %v239
      %v303 = vsel %vm301, %v302, %v239
      %v304 = vshrl.u32 %v303, 4
      %v305 = vand.u32 %v303, 15
      %v306 = vsub.s32 0, %v305
      %v307 = vsel %vm301, %v306, %v305
      %vm308 = vcmp.lt.s32.totalorder %v240, 0
      %v309 = vsub.s32 0, %v240
      %v310 = vsel %vm308, %v309, %v240
      %v311 = vshrl.u32 %v310, 4
      %v312 = vand.u32 %v310, 15
      %v313 = vsub.s32 0, %v312
      %v314 = vsel %vm308, %v313, %v312
      %vm315 = vcmp.lt.s32.totalorder %v241, 0
      %v316 = vsub.s32 0, %v241
      %v317 = vsel %vm315, %v316, %v241
      %v318 = vshrl.u32 %v317, 4
      %v319 = vand.u32 %v317, 15
      %v320 = vsub.s32 0, %v319
      %v321 = vsel %vm315, %v320, %v319
      %vm322 = vcmp.lt.s32.totalorder %v242, 0
      %v323 = vsub.s32 0, %v242
      %v324 = vsel %vm322, %v323, %v242
      %v325 = vshrl.u32 %v324, 4
      %v326 = vand.u32 %v324, 15
      %v327 = vsub.s32 0, %v326
      %v328 = vsel %vm322, %v327, %v326
      %vm329 = vcmp.lt.s32.totalorder %v243, 0
      %v330 = vsub.s32 0, %v243
      %v331 = vsel %vm329, %v330, %v243
      %v332 = vshrl.u32 %v331, 4
      %v333 = vand.u32 %v331, 15
      %v334 = vsub.s32 0, %v333
      %v335 = vsel %vm329, %v334, %v333
      %vm336 = vcmp.lt.s32.totalorder %v244, 0
      %v337 = vsub.s32 0, %v244
      %v338 = vsel %vm336, %v337, %v244
      %v339 = vshrl.u32 %v338, 4
      %v340 = vand.u32 %v338, 15
      %v341 = vsub.s32 0, %v340
      %v342 = vsel %vm336, %v341, %v340
      %vm343 = vcmp.lt.s32.totalorder %v245, 0
      %v344 = vsub.s32 0, %v245
      %v345 = vsel %vm343, %v344, %v245
      %v346 = vshrl.u32 %v345, 4
      %v347 = vand.u32 %v345, 15
      %v348 = vsub.s32 0, %v347
      %v349 = vsel %vm343, %v348, %v347
      %vm350 = vcmp.lt.s32.totalorder %v246, 0
      %v351 = vsub.s32 0, %v246
      %v352 = vsel %vm350, %v351, %v246
      %v353 = vshrl.u32 %v352, 4
      %v354 = vand.u32 %v352, 15
      %v355 = vsub.s32 0, %v354
      %v356 = vsel %vm350, %v355, %v354
      %vm357 = vcmp.lt.s32.totalorder %v247, 0
      %v358 = vsub.s32 0, %v247
      %v359 = vsel %vm357, %v358, %v247
      %v360 = vshrl.u32 %v359, 4
      %v361 = vand.u32 %v359, 15
      %v362 = vsub.s32 0, %v361
      %v363 = vsel %vm357, %v362, %v361
      %vm364 = vcmp.lt.s32.totalorder %v248, 0
      %v365 = vsub.s32 0, %v248
      %v366 = vsel %vm364, %v365, %v248
      %v367 = vshrl.u32 %v366, 4
      %v368 = vand.u32 %v366, 15
      %v369 = vsub.s32 0, %v368
      %v370 = vsel %vm364, %v369, %v368
      %vm371 = vcmp.lt.s32.totalorder %v249, 0
      %v372 = vsub.s32 0, %v249
      %v373 = vsel %vm371, %v372, %v249
      %v374 = vshrl.u32 %v373, 4
      %v375 = vand.u32 %v373, 15
      %v376 = vsub.s32 0, %v375
      %v377 = vsel %vm371, %v376, %v375
      %vm378 = vcmp.lt.s32.totalorder %v250, 0
      %v379 = vsub.s32 0, %v250
      %v380 = vsel %vm378, %v379, %v250
      %v381 = vshrl.u32 %v380, 4
      %v382 = vand.u32 %v380, 15
      %v383 = vsub.s32 0, %v382
      %v384 = vsel %vm378, %v383, %v382
      %vm385 = vcmp.lt.s32.totalorder %v251, 0
      %v386 = vsub.s32 0, %v251
      %v387 = vsel %vm385, %v386, %v251
      %v388 = vshrl.u32 %v387, 4
      %v389 = vand.u32 %v387, 15
      %v390 = vsub.s32 0, %v389
      %v391 = vsel %vm385, %v390, %v389
      %vm392 = vcmp.lt.s32.totalorder %v252, 0
      %v393 = vsub.s32 0, %v252
      %v394 = vsel %vm392, %v393, %v252
      %v395 = vshrl.u32 %v394, 4
      %v396 = vand.u32 %v394, 15
      %v397 = vsub.s32 0, %v396
      %v398 = vsel %vm392, %v397, %v396
      %vm399 = vcmp.lt.s32.totalorder %v253, 0
      %v400 = vsub.s32 0, %v253
      %v401 = vsel %vm399, %v400, %v253
      %v402 = vshrl.u32 %v401, 4
      %v403 = vand.u32 %v401, 15
      %v404 = vsub.s32 0, %v403
      %v405 = vsel %vm399, %v404, %v403
      %vm406 = vcmp.lt.s32.totalorder %v254, 0
      %v407 = vsub.s32 0, %v254
      %v408 = vsel %vm406, %v407, %v254
      %v409 = vshrl.u32 %v408, 4
      %v410 = vand.u32 %v408, 15
      %v411 = vsub.s32 0, %v410
      %v412 = vsel %vm406, %v411, %v410
      %vm413 = vcmp.lt.s32.totalorder %v255, 0
      %v414 = vsub.s32 0, %v255
      %v415 = vsel %vm413, %v414, %v255
      %v416 = vshrl.u32 %v415, 4
      %v417 = vand.u32 %v415, 15
      %v418 = vsub.s32 0, %v417
      %v419 = vsel %vm413, %v418, %v417
      %vm420 = vcmp.lt.s32.totalorder %v256, 0
      %v421 = vsub.s32 0, %v256
      %v422 = vsel %vm420, %v421, %v256
      %v423 = vshrl.u32 %v422, 4
      %v424 = vand.u32 %v422, 15
      %v425 = vsub.s32 0, %v424
      %v426 = vsel %vm420, %v425, %v424
      %vm427 = vcmp.lt.s32.totalorder %v257, 0
      %v428 = vsub.s32 0, %v257
      %v429 = vsel %vm427, %v428, %v257
      %v430 = vshrl.u32 %v429, 4
      %v431 = vand.u32 %v429, 15
      %v432 = vsub.s32 0, %v431
      %v433 = vsel %vm427, %v432, %v431
      %vm434 = vcmp.lt.s32.totalorder %v258, 0
      %v435 = vsub.s32 0, %v258
      %v436 = vsel %vm434, %v435, %v258
      %v437 = vshrl.u32 %v436, 4
      %v438 = vand.u32 %v436, 15
      %v439 = vsub.s32 0, %v438
      %v440 = vsel %vm434, %v439, %v438
      %vm441 = vcmp.lt.s32.totalorder %v259, 0
      %v442 = vsub.s32 0, %v259
      %v443 = vsel %vm441, %v442, %v259
      %v444 = vshrl.u32 %v443, 4
      %v445 = vand.u32 %v443, 15
      %v446 = vsub.s32 0, %v445
      %v447 = vsel %vm441, %v446, %v445
      %vm448 = vcmp.lt.s32.totalorder %v260, 0
      %v449 = vsub.s32 0, %v260
      %v450 = vsel %vm448, %v449, %v260
      %v451 = vshrl.u32 %v450, 4
      %v452 = vand.u32 %v450, 15
      %v453 = vsub.s32 0, %v452
      %v454 = vsel %vm448, %v453, %v452
      %vm455 = vcmp.lt.s32.totalorder %v261, 0
      %v456 = vsub.s32 0, %v261
      %v457 = vsel %vm455, %v456, %v261
      %v458 = vshrl.u32 %v457, 4
      %v459 = vand.u32 %v457, 15
      %v460 = vsub.s32 0, %v459
      %v461 = vsel %vm455, %v460, %v459
      %vm462 = vcmp.lt.s32.totalorder %v262, 0
      %v463 = vsub.s32 0, %v262
      %v464 = vsel %vm462, %v463, %v262
      %v465 = vshrl.u32 %v464, 4
      %v466 = vand.u32 %v464, 15
      %v467 = vsub.s32 0, %v466
      %v468 = vsel %vm462, %v467, %v466
      %vm469 = vcmp.lt.s32.totalorder %v263, 0
      %v470 = vsub.s32 0, %v263
      %v471 = vsel %vm469, %v470, %v263
      %v472 = vshrl.u32 %v471, 4
      %v473 = vand.u32 %v471, 15
      %v474 = vsub.s32 0, %v473
      %v475 = vsel %vm469, %v474, %v473
      %vm476 = vcmp.lt.s32.totalorder %v264, 0
      %v477 = vsub.s32 0, %v264
      %v478 = vsel %vm476, %v477, %v264
      %v479 = vshrl.u32 %v478, 4
      %v480 = vand.u32 %v478, 15
      %v481 = vsub.s32 0, %v480
      %v482 = vsel %vm476, %v481, %v480
      %vm483 = vcmp.lt.s32.totalorder %v265, 0
      %v484 = vsub.s32 0, %v265
      %v485 = vsel %vm483, %v484, %v265
      %v486 = vshrl.u32 %v485, 4
      %v487 = vand.u32 %v485, 15
      %v488 = vsub.s32 0, %v487
      %v489 = vsel %vm483, %v488, %v487
      %vm490 = vcmp.ne.s32.totalorder %v272, 0
      %vm491 = vcmp.ne.s32.totalorder %v279, 0
      %vm492 = vcmp.ne.s32.totalorder %v286, 0
      %vm493 = vcmp.ne.s32.totalorder %v293, 0
      %vm494 = vcmp.ne.s32.totalorder %v300, 0
      %vm495 = vcmp.ne.s32.totalorder %v307, 0
      %vm496 = vcmp.ne.s32.totalorder %v314, 0
      %vm497 = vcmp.ne.s32.totalorder %v321, 0
      %vm498 = vcmp.ne.s32.totalorder %v328, 0
      %vm499 = vcmp.ne.s32.totalorder %v335, 0
      %vm500 = vcmp.ne.s32.totalorder %v342, 0
      %vm501 = vcmp.ne.s32.totalorder %v349, 0
      %vm502 = vcmp.ne.s32.totalorder %v356, 0
      %vm503 = vcmp.ne.s32.totalorder %v363, 0
      %vm504 = vcmp.ne.s32.totalorder %v370, 0
      %vm505 = vcmp.ne.s32.totalorder %v377, 0
      %vm506 = vcmp.ne.s32.totalorder %v384, 0
      %vm507 = vcmp.ne.s32.totalorder %v391, 0
      %vm508 = vcmp.ne.s32.totalorder %v398, 0
      %vm509 = vcmp.ne.s32.totalorder %v405, 0
      %vm510 = vcmp.ne.s32.totalorder %v412, 0
      %vm511 = vcmp.ne.s32.totalorder %v419, 0
      %vm512 = vcmp.ne.s32.totalorder %v426, 0
      %vm513 = vcmp.ne.s32.totalorder %v433, 0
      %vm514 = vcmp.ne.s32.totalorder %v440, 0
      %vm515 = vcmp.ne.s32.totalorder %v447, 0
      %vm516 = vcmp.ne.s32.totalorder %v454, 0
      %vm517 = vcmp.ne.s32.totalorder %v461, 0
      %vm518 = vcmp.ne.s32.totalorder %v468, 0
      %vm519 = vcmp.ne.s32.totalorder %v475, 0
      %vm520 = vcmp.ne.s32.totalorder %v482, 0
      %vm521 = vcmp.ne.s32.totalorder %v489, 0
      %vm522 = vcmp.lt.s32.totalorder %v272, 0
      %vm523 = vcmp.lt.s32.totalorder %v279, 0
      %vm524 = vcmp.lt.s32.totalorder %v286, 0
      %vm525 = vcmp.lt.s32.totalorder %v293, 0
      %vm526 = vcmp.lt.s32.totalorder %v300, 0
      %vm527 = vcmp.lt.s32.totalorder %v307, 0
      %vm528 = vcmp.lt.s32.totalorder %v314, 0
      %vm529 = vcmp.lt.s32.totalorder %v321, 0
      %vm530 = vcmp.lt.s32.totalorder %v328, 0
      %vm531 = vcmp.lt.s32.totalorder %v335, 0
      %vm532 = vcmp.lt.s32.totalorder %v342, 0
      %vm533 = vcmp.lt.s32.totalorder %v349, 0
      %vm534 = vcmp.lt.s32.totalorder %v356, 0
      %vm535 = vcmp.lt.s32.totalorder %v363, 0
      %vm536 = vcmp.lt.s32.totalorder %v370, 0
      %vm537 = vcmp.lt.s32.totalorder %v377, 0
      %vm538 = vcmp.lt.s32.totalorder %v384, 0
      %vm539 = vcmp.lt.s32.totalorder %v391, 0
      %vm540 = vcmp.lt.s32.totalorder %v398, 0
      %vm541 = vcmp.lt.s32.totalorder %v405, 0
      %vm542 = vcmp.lt.s32.totalorder %v412, 0
      %vm543 = vcmp.lt.s32.totalorder %v419, 0
      %vm544 = vcmp.lt.s32.totalorder %v426, 0
      %vm545 = vcmp.lt.s32.totalorder %v433, 0
      %vm546 = vcmp.lt.s32.totalorder %v440, 0
      %vm547 = vcmp.lt.s32.totalorder %v447, 0
      %vm548 = vcmp.lt.s32.totalorder %v454, 0
      %vm549 = vcmp.lt.s32.totalorder %v461, 0
      %vm550 = vcmp.lt.s32.totalorder %v468, 0
      %vm551 = vcmp.lt.s32.totalorder %v475, 0
      %vm552 = vcmp.lt.s32.totalorder %v482, 0
      %vm553 = vcmp.lt.s32.totalorder %v489, 0
      %vm554 = vmand %vm522, %vm490
      %vm555 = vmand %vm523, %vm491
      %vm556 = vmand %vm524, %vm492
      %vm557 = vmand %vm525, %vm493
      %vm558 = vmand %vm526, %vm494
      %vm559 = vmand %vm527, %vm495
      %vm560 = vmand %vm528, %vm496
      %vm561 = vmand %vm529, %vm497
      %vm562 = vmand %vm530, %vm498
      %vm563 = vmand %vm531, %vm499
      %vm564 = vmand %vm532, %vm500
      %vm565 = vmand %vm533, %vm501
      %vm566 = vmand %vm534, %vm502
      %vm567 = vmand %vm535, %vm503
      %vm568 = vmand %vm536, %vm504
      %vm569 = vmand %vm537, %vm505
      %vm570 = vmand %vm538, %vm506
      %vm571 = vmand %vm539, %vm507
      %vm572 = vmand %vm540, %vm508
      %vm573 = vmand %vm541, %vm509
      %vm574 = vmand %vm542, %vm510
      %vm575 = vmand %vm543, %vm511
      %vm576 = vmand %vm544, %vm512
      %vm577 = vmand %vm545, %vm513
      %vm578 = vmand %vm546, %vm514
      %vm579 = vmand %vm547, %vm515
      %vm580 = vmand %vm548, %vm516
      %vm581 = vmand %vm549, %vm517
      %vm582 = vmand %vm550, %vm518
      %vm583 = vmand %vm551, %vm519
      %vm584 = vmand %vm552, %vm520
      %vm585 = vmand %vm553, %vm521
      %v586 = vadd.s32 %v272, 16
      %v587 = vadd.s32 %v279, 16
      %v588 = vadd.s32 %v286, 16
      %v589 = vadd.s32 %v293, 16
      %v590 = vadd.s32 %v300, 16
      %v591 = vadd.s32 %v307, 16
      %v592 = vadd.s32 %v314, 16
      %v593 = vadd.s32 %v321, 16
      %v594 = vadd.s32 %v328, 16
      %v595 = vadd.s32 %v335, 16
      %v596 = vadd.s32 %v342, 16
      %v597 = vadd.s32 %v349, 16
      %v598 = vadd.s32 %v356, 16
      %v599 = vadd.s32 %v363, 16
      %v600 = vadd.s32 %v370, 16
      %v601 = vadd.s32 %v377, 16
      %v602 = vadd.s32 %v384, 16
      %v603 = vadd.s32 %v391, 16
      %v604 = vadd.s32 %v398, 16
      %v605 = vadd.s32 %v405, 16
      %v606 = vadd.s32 %v412, 16
      %v607 = vadd.s32 %v419, 16
      %v608 = vadd.s32 %v426, 16
      %v609 = vadd.s32 %v433, 16
      %v610 = vadd.s32 %v440, 16
      %v611 = vadd.s32 %v447, 16
      %v612 = vadd.s32 %v454, 16
      %v613 = vadd.s32 %v461, 16
      %v614 = vadd.s32 %v468, 16
      %v615 = vadd.s32 %v475, 16
      %v616 = vadd.s32 %v482, 16
      %v617 = vadd.s32 %v489, 16
      %v618 = vsel %vm554, %v586, %v272
      %v619 = vsel %vm555, %v587, %v279
      %v620 = vsel %vm556, %v588, %v286
      %v621 = vsel %vm557, %v589, %v293
      %v622 = vsel %vm558, %v590, %v300
      %v623 = vsel %vm559, %v591, %v307
      %v624 = vsel %vm560, %v592, %v314
      %v625 = vsel %vm561, %v593, %v321
      %v626 = vsel %vm562, %v594, %v328
      %v627 = vsel %vm563, %v595, %v335
      %v628 = vsel %vm564, %v596, %v342
      %v629 = vsel %vm565, %v597, %v349
      %v630 = vsel %vm566, %v598, %v356
      %v631 = vsel %vm567, %v599, %v363
      %v632 = vsel %vm568, %v600, %v370
      %v633 = vsel %vm569, %v601, %v377
      %v634 = vsel %vm570, %v602, %v384
      %v635 = vsel %vm571, %v603, %v391
      %v636 = vsel %vm572, %v604, %v398
      %v637 = vsel %vm573, %v605, %v405
      %v638 = vsel %vm574, %v606, %v412
      %v639 = vsel %vm575, %v607, %v419
      %v640 = vsel %vm576, %v608, %v426
      %v641 = vsel %vm577, %v609, %v433
      %v642 = vsel %vm578, %v610, %v440
      %v643 = vsel %vm579, %v611, %v447
      %v644 = vsel %vm580, %v612, %v454
      %v645 = vsel %vm581, %v613, %v461
      %v646 = vsel %vm582, %v614, %v468
      %v647 = vsel %vm583, %v615, %v475
      %v648 = vsel %vm584, %v616, %v482
      %v649 = vsel %vm585, %v617, %v489
      %vm650 = vcmp.ne.s32.totalorder %v618, 0
      %vm651 = vcmp.ne.s32.totalorder %v619, 0
      %vm652 = vcmp.ne.s32.totalorder %v620, 0
      %vm653 = vcmp.ne.s32.totalorder %v621, 0
      %vm654 = vcmp.ne.s32.totalorder %v622, 0
      %vm655 = vcmp.ne.s32.totalorder %v623, 0
      %vm656 = vcmp.ne.s32.totalorder %v624, 0
      %vm657 = vcmp.ne.s32.totalorder %v625, 0
      %vm658 = vcmp.ne.s32.totalorder %v626, 0
      %vm659 = vcmp.ne.s32.totalorder %v627, 0
      %vm660 = vcmp.ne.s32.totalorder %v628, 0
      %vm661 = vcmp.ne.s32.totalorder %v629, 0
      %vm662 = vcmp.ne.s32.totalorder %v630, 0
      %vm663 = vcmp.ne.s32.totalorder %v631, 0
      %vm664 = vcmp.ne.s32.totalorder %v632, 0
      %vm665 = vcmp.ne.s32.totalorder %v633, 0
      %vm666 = vcmp.ne.s32.totalorder %v634, 0
      %vm667 = vcmp.ne.s32.totalorder %v635, 0
      %vm668 = vcmp.ne.s32.totalorder %v636, 0
      %vm669 = vcmp.ne.s32.totalorder %v637, 0
      %vm670 = vcmp.ne.s32.totalorder %v638, 0
      %vm671 = vcmp.ne.s32.totalorder %v639, 0
      %vm672 = vcmp.ne.s32.totalorder %v640, 0
      %vm673 = vcmp.ne.s32.totalorder %v641, 0
      %vm674 = vcmp.ne.s32.totalorder %v642, 0
      %vm675 = vcmp.ne.s32.totalorder %v643, 0
      %vm676 = vcmp.ne.s32.totalorder %v644, 0
      %vm677 = vcmp.ne.s32.totalorder %v645, 0
      %vm678 = vcmp.ne.s32.totalorder %v646, 0
      %vm679 = vcmp.ne.s32.totalorder %v647, 0
      %vm680 = vcmp.ne.s32.totalorder %v648, 0
      %vm681 = vcmp.ne.s32.totalorder %v649, 0
      %vm682 = vcmp.ne.s32.totalorder %v618, 15
      %vm683 = vcmp.ne.s32.totalorder %v619, 15
      %vm684 = vcmp.ne.s32.totalorder %v620, 15
      %vm685 = vcmp.ne.s32.totalorder %v621, 15
      %vm686 = vcmp.ne.s32.totalorder %v622, 15
      %vm687 = vcmp.ne.s32.totalorder %v623, 15
      %vm688 = vcmp.ne.s32.totalorder %v624, 15
      %vm689 = vcmp.ne.s32.totalorder %v625, 15
      %vm690 = vcmp.ne.s32.totalorder %v626, 15
      %vm691 = vcmp.ne.s32.totalorder %v627, 15
      %vm692 = vcmp.ne.s32.totalorder %v628, 15
      %vm693 = vcmp.ne.s32.totalorder %v629, 15
      %vm694 = vcmp.ne.s32.totalorder %v630, 15
      %vm695 = vcmp.ne.s32.totalorder %v631, 15
      %vm696 = vcmp.ne.s32.totalorder %v632, 15
      %vm697 = vcmp.ne.s32.totalorder %v633, 15
      %vm698 = vcmp.ne.s32.totalorder %v634, 15
      %vm699 = vcmp.ne.s32.totalorder %v635, 15
      %vm700 = vcmp.ne.s32.totalorder %v636, 15
      %vm701 = vcmp.ne.s32.totalorder %v637, 15
      %vm702 = vcmp.ne.s32.totalorder %v638, 15
      %vm703 = vcmp.ne.s32.totalorder %v639, 15
      %vm704 = vcmp.ne.s32.totalorder %v640, 15
      %vm705 = vcmp.ne.s32.totalorder %v641, 15
      %vm706 = vcmp.ne.s32.totalorder %v642, 15
      %vm707 = vcmp.ne.s32.totalorder %v643, 15
      %vm708 = vcmp.ne.s32.totalorder %v644, 15
      %vm709 = vcmp.ne.s32.totalorder %v645, 15
      %vm710 = vcmp.ne.s32.totalorder %v646, 15
      %vm711 = vcmp.ne.s32.totalorder %v647, 15
      %vm712 = vcmp.ne.s32.totalorder %v648, 15
      %vm713 = vcmp.ne.s32.totalorder %v649, 15
      %v714 = vsel %vm650, %v196, 0.0
      %v715 = vsel %vm651, %v197, 0.0
      %v716 = vsel %vm652, %v198, 0.0
      %v717 = vsel %vm653, %v199, 0.0
      %v718 = vsel %vm654, %v200, 0.0
      %v719 = vsel %vm655, %v201, 0.0
      %v720 = vsel %vm656, %v202, 0.0
      %v721 = vsel %vm657, %v203, 0.0
      %v722 = vsel %vm658, %v204, 0.0
      %v723 = vsel %vm659, %v205, 0.0
      %v724 = vsel %vm660, %v206, 0.0
      %v725 = vsel %vm661, %v207, 0.0
      %v726 = vsel %vm662, %v208, 0.0
      %v727 = vsel %vm663, %v209, 0.0
      %v728 = vsel %vm664, %v210, 0.0
      %v729 = vsel %vm665, %v211, 0.0
      %v730 = vsel %vm666, %v212, 0.0
      %v731 = vsel %vm667, %v213, 0.0
      %v732 = vsel %vm668, %v214, 0.0
      %v733 = vsel %vm669, %v215, 0.0
      %v734 = vsel %vm670, %v216, 0.0
      %v735 = vsel %vm671, %v217, 0.0
      %v736 = vsel %vm672, %v218, 0.0
      %v737 = vsel %vm673, %v219, 0.0
      %v738 = vsel %vm674, %v220, 0.0
      %v739 = vsel %vm675, %v221, 0.0
      %v740 = vsel %vm676, %v222, 0.0
      %v741 = vsel %vm677, %v223, 0.0
      %v742 = vsel %vm678, %v224, 0.0
      %v743 = vsel %vm679, %v225, 0.0
      %v744 = vsel %vm680, %v226, 0.0
      %v745 = vsel %vm681, %v227, 0.0
      %vm746 = vcmask 31744
      %747 = vst.msk [vmem:[#allocation2] sm:$0xff] %vm746, %v714
      %748 = vst.msk [vmem:[#allocation2 + $0x8] sm:$0xff] %vm746, %v715
      %749 = vst.msk [vmem:[#allocation2 + $0x10] sm:$0xff] %vm746, %v716
      %750 = vst.msk [vmem:[#allocation2 + $0x18] sm:$0xff] %vm746, %v717
      %751 = vst.msk [vmem:[#allocation2 + $0x20] sm:$0xff] %vm746, %v718
      %752 = vst.msk [vmem:[#allocation2 + $0x28] sm:$0xff] %vm746, %v719
      %753 = vst.msk [vmem:[#allocation2 + $0x30] sm:$0xff] %vm746, %v720
      %754 = vst.msk [vmem:[#allocation2 + $0x38] sm:$0xff] %vm746, %v721
      %755 = vst.msk [vmem:[#allocation2 + $0x40] sm:$0xff] %vm746, %v722
      %756 = vst.msk [vmem:[#allocation2 + $0x48] sm:$0xff] %vm746, %v723
      %757 = vst.msk [vmem:[#allocation2 + $0x50] sm:$0xff] %vm746, %v724
      %758 = vst.msk [vmem:[#allocation2 + $0x58] sm:$0xff] %vm746, %v725
      %759 = vst.msk [vmem:[#allocation2 + $0x60] sm:$0xff] %vm746, %v726
      %760 = vst.msk [vmem:[#allocation2 + $0x68] sm:$0xff] %vm746, %v727
      %761 = vst.msk [vmem:[#allocation2 + $0x70] sm:$0xff] %vm746, %v728
      %762 = vst.msk [vmem:[#allocation2 + $0x78] sm:$0xff] %vm746, %v729
      %763 = vst.msk [vmem:[#allocation2 + $0x80] sm:$0xff] %vm746, %v730
      %764 = vst.msk [vmem:[#allocation2 + $0x88] sm:$0xff] %vm746, %v731
      %765 = vst.msk [vmem:[#allocation2 + $0x90] sm:$0xff] %vm746, %v732
      %766 = vst.msk [vmem:[#allocation2 + $0x98] sm:$0xff] %vm746, %v733
      %767 = vst.msk [vmem:[#allocation2 + $0xa0] sm:$0xff] %vm746, %v734
      %768 = vst.msk [vmem:[#allocation2 + $0xa8] sm:$0xff] %vm746, %v735
      %769 = vst.msk [vmem:[#allocation2 + $0xb0] sm:$0xff] %vm746, %v736
      %770 = vst.msk [vmem:[#allocation2 + $0xb8] sm:$0xff] %vm746, %v737
      %771 = vst.msk [vmem:[#allocation2 + $0xc0] sm:$0xff] %vm746, %v738
      %772 = vst.msk [vmem:[#allocation2 + $0xc8] sm:$0xff] %vm746, %v739
      %773 = vst.msk [vmem:[#allocation2 + $0xd0] sm:$0xff] %vm746, %v740
      %774 = vst.msk [vmem:[#allocation2 + $0xd8] sm:$0xff] %vm746, %v741
      %775 = vst.msk [vmem:[#allocation2 + $0xe0] sm:$0xff] %vm746, %v742
      %776 = vst.msk [vmem:[#allocation2 + $0xe8] sm:$0xff] %vm746, %v743
      %777 = vst.msk [vmem:[#allocation2 + $0xf0] sm:$0xff] %vm746, %v744
      %778 = vst.msk [vmem:[#allocation2 + $0xf8] sm:$0xff] %vm746, %v745
      %812 = vrot.lane.b32.xlu0 %v196, 4
      %v813 = vpop.permute.xlu0 %812
      %814 = vrot.lane.b32.xlu0 %v197, 4
      %v815 = vpop.permute.xlu0 %814
      %816 = vrot.lane.b32.xlu0 %v198, 4
      %v817 = vpop.permute.xlu0 %816
      %818 = vrot.lane.b32.xlu0 %v199, 4
      %v819 = vpop.permute.xlu0 %818
      %820 = vrot.lane.b32.xlu0 %v200, 4
      %v821 = vpop.permute.xlu0 %820
      %822 = vrot.lane.b32.xlu0 %v201, 4
      %v823 = vpop.permute.xlu0 %822
      %824 = vrot.lane.b32.xlu0 %v202, 4
      %v825 = vpop.permute.xlu0 %824
      %826 = vrot.lane.b32.xlu0 %v203, 4
      %v827 = vpop.permute.xlu0 %826
      %828 = vrot.lane.b32.xlu0 %v204, 4
      %v829 = vpop.permute.xlu0 %828
      %830 = vrot.lane.b32.xlu0 %v205, 4
      %v831 = vpop.permute.xlu0 %830
      %832 = vrot.lane.b32.xlu0 %v206, 4
      %v833 = vpop.permute.xlu0 %832
      %834 = vrot.lane.b32.xlu0 %v207, 4
      %v835 = vpop.permute.xlu0 %834
      %836 = vrot.lane.b32.xlu0 %v208, 4
      %v837 = vpop.permute.xlu0 %836
      %838 = vrot.lane.b32.xlu0 %v209, 4
      %v839 = vpop.permute.xlu0 %838
      %840 = vrot.lane.b32.xlu0 %v210, 4
      %v841 = vpop.permute.xlu0 %840
      %842 = vrot.lane.b32.xlu0 %v211, 4
      %v843 = vpop.permute.xlu0 %842
      %844 = vrot.lane.b32.xlu0 %v212, 4
      %v845 = vpop.permute.xlu0 %844
      %846 = vrot.lane.b32.xlu0 %v213, 4
      %v847 = vpop.permute.xlu0 %846
      %848 = vrot.lane.b32.xlu0 %v214, 4
      %v849 = vpop.permute.xlu0 %848
      %850 = vrot.lane.b32.xlu0 %v215, 4
      %v851 = vpop.permute.xlu0 %850
      %852 = vrot.lane.b32.xlu0 %v216, 4
      %v853 = vpop.permute.xlu0 %852
      %854 = vrot.lane.b32.xlu0 %v217, 4
      %v855 = vpop.permute.xlu0 %854
      %856 = vrot.lane.b32.xlu0 %v218, 4
      %v857 = vpop.permute.xlu0 %856
      %858 = vrot.lane.b32.xlu0 %v219, 4
      %v859 = vpop.permute.xlu0 %858
      %860 = vrot.lane.b32.xlu0 %v220, 4
      %v861 = vpop.permute.xlu0 %860
      %862 = vrot.lane.b32.xlu0 %v221, 4
      %v863 = vpop.permute.xlu0 %862
      %864 = vrot.lane.b32.xlu0 %v222, 4
      %v865 = vpop.permute.xlu0 %864
      %866 = vrot.lane.b32.xlu0 %v223, 4
      %v867 = vpop.permute.xlu0 %866
      %868 = vrot.lane.b32.xlu0 %v224, 4
      %v869 = vpop.permute.xlu0 %868
      %870 = vrot.lane.b32.xlu0 %v225, 4
      %v871 = vpop.permute.xlu0 %870
      %872 = vrot.lane.b32.xlu0 %v226, 4
      %v873 = vpop.permute.xlu0 %872
      %874 = vrot.lane.b32.xlu0 %v227, 4
      %v875 = vpop.permute.xlu0 %874
      %876 = vrot.lane.b32.xlu0 %v228, 4
      %v877 = vpop.permute.xlu0 %876
      %vm911 = vcmask 64545
      %912 = vst.msk [vmem:[#allocation2 - $0x1] sm:$0xfe] %vm911, %v813
      %vm913 = vcmask 64544
      %914 = vst.msk [vmem:[#allocation2 + $0x7] sm:$0xff] %vm913, %v815
      %915 = vst.msk [vmem:[#allocation2 + $0xf] sm:$0xff] %vm913, %v817
      %916 = vst.msk [vmem:[#allocation2 + $0x17] sm:$0xff] %vm913, %v819
      %917 = vst.msk [vmem:[#allocation2 + $0x1f] sm:$0xff] %vm913, %v821
      %918 = vst.msk [vmem:[#allocation2 + $0x27] sm:$0xff] %vm913, %v823
      %919 = vst.msk [vmem:[#allocation2 + $0x2f] sm:$0xff] %vm913, %v825
      %920 = vst.msk [vmem:[#allocation2 + $0x37] sm:$0xff] %vm913, %v827
      %921 = vst.msk [vmem:[#allocation2 + $0x3f] sm:$0xff] %vm913, %v829
      %922 = vst.msk [vmem:[#allocation2 + $0x47] sm:$0xff] %vm913, %v831
      %923 = vst.msk [vmem:[#allocation2 + $0x4f] sm:$0xff] %vm913, %v833
      %924 = vst.msk [vmem:[#allocation2 + $0x57] sm:$0xff] %vm913, %v835
      %925 = vst.msk [vmem:[#allocation2 + $0x5f] sm:$0xff] %vm913, %v837
      %926 = vst.msk [vmem:[#allocation2 + $0x67] sm:$0xff] %vm913, %v839
      %927 = vst.msk [vmem:[#allocation2 + $0x6f] sm:$0xff] %vm913, %v841
      %928 = vst.msk [vmem:[#allocation2 + $0x77] sm:$0xff] %vm913, %v843
      %929 = vst.msk [vmem:[#allocation2 + $0x7f] sm:$0xff] %vm913, %v845
      %930 = vst.msk [vmem:[#allocation2 + $0x87] sm:$0xff] %vm913, %v847
      %931 = vst.msk [vmem:[#allocation2 + $0x8f] sm:$0xff] %vm913, %v849
      %932 = vst.msk [vmem:[#allocation2 + $0x97] sm:$0xff] %vm913, %v851
      %933 = vst.msk [vmem:[#allocation2 + $0x9f] sm:$0xff] %vm913, %v853
      %934 = vst.msk [vmem:[#allocation2 + $0xa7] sm:$0xff] %vm913, %v855
      %935 = vst.msk [vmem:[#allocation2 + $0xaf] sm:$0xff] %vm913, %v857
      %936 = vst.msk [vmem:[#allocation2 + $0xb7] sm:$0xff] %vm913, %v859
      %937 = vst.msk [vmem:[#allocation2 + $0xbf] sm:$0xff] %vm913, %v861
      %938 = vst.msk [vmem:[#allocation2 + $0xc7] sm:$0xff] %vm913, %v863
      %939 = vst.msk [vmem:[#allocation2 + $0xcf] sm:$0xff] %vm913, %v865
      %940 = vst.msk [vmem:[#allocation2 + $0xd7] sm:$0xff] %vm913, %v867
      %941 = vst.msk [vmem:[#allocation2 + $0xdf] sm:$0xff] %vm913, %v869
      %942 = vst.msk [vmem:[#allocation2 + $0xe7] sm:$0xff] %vm913, %v871
      %943 = vst.msk [vmem:[#allocation2 + $0xef] sm:$0xff] %vm913, %v873
      %944 = vst.msk [vmem:[#allocation2 + $0xf7] sm:$0xff] %vm913, %v875
      %vm945 = vcmask 57376
      %946 = vst.msk [vmem:[#allocation2 + $0xff] sm:$0x1] %vm945, %v877
      %vm947 = vcmask 1045504
      %v948 = vrot.slane %v196, 2
      %v949 = vrot.slane %v197, 2
      %v950 = vsel %vm947, %v948, %v949
      %v951 = vrot.slane %v198, 2
      %v952 = vsel %vm947, %v949, %v951
      %v953 = vrot.slane %v199, 2
      %v954 = vsel %vm947, %v951, %v953
      %v955 = vrot.slane %v200, 2
      %v956 = vsel %vm947, %v953, %v955
      %v957 = vrot.slane %v201, 2
      %v958 = vsel %vm947, %v955, %v957
      %v959 = vrot.slane %v202, 2
      %v960 = vsel %vm947, %v957, %v959
      %v961 = vrot.slane %v203, 2
      %v962 = vsel %vm947, %v959, %v961
      %v963 = vrot.slane %v204, 2
      %v964 = vsel %vm947, %v961, %v963
      %v965 = vrot.slane %v205, 2
      %v966 = vsel %vm947, %v963, %v965
      %v967 = vrot.slane %v206, 2
      %v968 = vsel %vm947, %v965, %v967
      %v969 = vrot.slane %v207, 2
      %v970 = vsel %vm947, %v967, %v969
      %v971 = vrot.slane %v208, 2
      %v972 = vsel %vm947, %v969, %v971
      %v973 = vrot.slane %v209, 2
      %v974 = vsel %vm947, %v971, %v973
      %v975 = vrot.slane %v210, 2
      %v976 = vsel %vm947, %v973, %v975
      %v977 = vrot.slane %v211, 2
      %v978 = vsel %vm947, %v975, %v977
      %v979 = vrot.slane %v212, 2
      %v980 = vsel %vm947, %v977, %v979
      %v981 = vrot.slane %v213, 2
      %v982 = vsel %vm947, %v979, %v981
      %v983 = vrot.slane %v214, 2
      %v984 = vsel %vm947, %v981, %v983
      %v985 = vrot.slane %v215, 2
      %v986 = vsel %vm947, %v983, %v985
      %v987 = vrot.slane %v216, 2
      %v988 = vsel %vm947, %v985, %v987
      %v989 = vrot.slane %v217, 2
      %v990 = vsel %vm947, %v987, %v989
      %v991 = vrot.slane %v218, 2
      %v992 = vsel %vm947, %v989, %v991
      %v993 = vrot.slane %v219, 2
      %v994 = vsel %vm947, %v991, %v993
      %v995 = vrot.slane %v220, 2
      %v996 = vsel %vm947, %v993, %v995
      %v997 = vrot.slane %v221, 2
      %v998 = vsel %vm947, %v995, %v997
      %v999 = vrot.slane %v222, 2
      %v1000 = vsel %vm947, %v997, %v999
      %v1001 = vrot.slane %v223, 2
      %v1002 = vsel %vm947, %v999, %v1001
      %v1003 = vrot.slane %v224, 2
      %v1004 = vsel %vm947, %v1001, %v1003
      %v1005 = vrot.slane %v225, 2
      %v1006 = vsel %vm947, %v1003, %v1005
      %v1007 = vrot.slane %v226, 2
      %v1008 = vsel %vm947, %v1005, %v1007
      %v1009 = vrot.slane %v227, 2
      %v1010 = vsel %vm947, %v1007, %v1009
      %v1011 = vrot.slane %v228, 2
      %v1012 = vsel %vm947, %v1009, %v1011
      %v1045 = vsel %vm682, %v950, 0.0
      %v1046 = vsel %vm683, %v952, 0.0
      %v1047 = vsel %vm684, %v954, 0.0
      %v1048 = vsel %vm685, %v956, 0.0
      %v1049 = vsel %vm686, %v958, 0.0
      %v1050 = vsel %vm687, %v960, 0.0
      %v1051 = vsel %vm688, %v962, 0.0
      %v1052 = vsel %vm689, %v964, 0.0
      %v1053 = vsel %vm690, %v966, 0.0
      %v1054 = vsel %vm691, %v968, 0.0
      %v1055 = vsel %vm692, %v970, 0.0
      %v1056 = vsel %vm693, %v972, 0.0
      %v1057 = vsel %vm694, %v974, 0.0
      %v1058 = vsel %vm695, %v976, 0.0
      %v1059 = vsel %vm696, %v978, 0.0
      %v1060 = vsel %vm697, %v980, 0.0
      %v1061 = vsel %vm698, %v982, 0.0
      %v1062 = vsel %vm699, %v984, 0.0
      %v1063 = vsel %vm700, %v986, 0.0
      %v1064 = vsel %vm701, %v988, 0.0
      %v1065 = vsel %vm702, %v990, 0.0
      %v1066 = vsel %vm703, %v992, 0.0
      %v1067 = vsel %vm704, %v994, 0.0
      %v1068 = vsel %vm705, %v996, 0.0
      %v1069 = vsel %vm706, %v998, 0.0
      %v1070 = vsel %vm707, %v1000, 0.0
      %v1071 = vsel %vm708, %v1002, 0.0
      %v1072 = vsel %vm709, %v1004, 0.0
      %v1073 = vsel %vm710, %v1006, 0.0
      %v1074 = vsel %vm711, %v1008, 0.0
      %v1075 = vsel %vm712, %v1010, 0.0
      %v1076 = vsel %vm713, %v1012, 0.0
      %1109 = vrot.lane.b32.xlu0 %v1045, 8
      %v1110 = vpop.permute.xlu0 %1109
      %1111 = vrot.lane.b32.xlu0 %v1046, 8
      %v1112 = vpop.permute.xlu0 %1111
      %1113 = vrot.lane.b32.xlu0 %v1047, 8
      %v1114 = vpop.permute.xlu0 %1113
      %1115 = vrot.lane.b32.xlu0 %v1048, 8
      %v1116 = vpop.permute.xlu0 %1115
      %1117 = vrot.lane.b32.xlu0 %v1049, 8
      %v1118 = vpop.permute.xlu0 %1117
      %1119 = vrot.lane.b32.xlu0 %v1050, 8
      %v1120 = vpop.permute.xlu0 %1119
      %1121 = vrot.lane.b32.xlu0 %v1051, 8
      %v1122 = vpop.permute.xlu0 %1121
      %1123 = vrot.lane.b32.xlu0 %v1052, 8
      %v1124 = vpop.permute.xlu0 %1123
      %1125 = vrot.lane.b32.xlu0 %v1053, 8
      %v1126 = vpop.permute.xlu0 %1125
      %1127 = vrot.lane.b32.xlu0 %v1054, 8
      %v1128 = vpop.permute.xlu0 %1127
      %1129 = vrot.lane.b32.xlu0 %v1055, 8
      %v1130 = vpop.permute.xlu0 %1129
      %1131 = vrot.lane.b32.xlu0 %v1056, 8
      %v1132 = vpop.permute.xlu0 %1131
      %1133 = vrot.lane.b32.xlu0 %v1057, 8
      %v1134 = vpop.permute.xlu0 %1133
      %1135 = vrot.lane.b32.xlu0 %v1058, 8
      %v1136 = vpop.permute.xlu0 %1135
      %1137 = vrot.lane.b32.xlu0 %v1059, 8
      %v1138 = vpop.permute.xlu0 %1137
      %1139 = vrot.lane.b32.xlu0 %v1060, 8
      %v1140 = vpop.permute.xlu0 %1139
      %1141 = vrot.lane.b32.xlu0 %v1061, 8
      %v1142 = vpop.permute.xlu0 %1141
      %1143 = vrot.lane.b32.xlu0 %v1062, 8
      %v1144 = vpop.permute.xlu0 %1143
      %1145 = vrot.lane.b32.xlu0 %v1063, 8
      %v1146 = vpop.permute.xlu0 %1145
      %1147 = vrot.lane.b32.xlu0 %v1064, 8
      %v1148 = vpop.permute.xlu0 %1147
      %1149 = vrot.lane.b32.xlu0 %v1065, 8
      %v1150 = vpop.permute.xlu0 %1149
      %1151 = vrot.lane.b32.xlu0 %v1066, 8
      %v1152 = vpop.permute.xlu0 %1151
      %1153 = vrot.lane.b32.xlu0 %v1067, 8
      %v1154 = vpop.permute.xlu0 %1153
      %1155 = vrot.lane.b32.xlu0 %v1068, 8
      %v1156 = vpop.permute.xlu0 %1155
      %1157 = vrot.lane.b32.xlu0 %v1069, 8
      %v1158 = vpop.permute.xlu0 %1157
      %1159 = vrot.lane.b32.xlu0 %v1070, 8
      %v1160 = vpop.permute.xlu0 %1159
      %1161 = vrot.lane.b32.xlu0 %v1071, 8
      %v1162 = vpop.permute.xlu0 %1161
      %1163 = vrot.lane.b32.xlu0 %v1072, 8
      %v1164 = vpop.permute.xlu0 %1163
      %1165 = vrot.lane.b32.xlu0 %v1073, 8
      %v1166 = vpop.permute.xlu0 %1165
      %1167 = vrot.lane.b32.xlu0 %v1074, 8
      %v1168 = vpop.permute.xlu0 %1167
      %1169 = vrot.lane.b32.xlu0 %v1075, 8
      %v1170 = vpop.permute.xlu0 %1169
      %1171 = vrot.lane.b32.xlu0 %v1076, 8
      %v1172 = vpop.permute.xlu0 %1171
      %vm1205 = vcmask 97344
      %1206 = vst.msk [vmem:[#allocation2] sm:$0xff] %vm1205, %v1110
      %1207 = vst.msk [vmem:[#allocation2 + $0x8] sm:$0xff] %vm1205, %v1112
      %1208 = vst.msk [vmem:[#allocation2 + $0x10] sm:$0xff] %vm1205, %v1114
      %1209 = vst.msk [vmem:[#allocation2 + $0x18] sm:$0xff] %vm1205, %v1116
      %1210 = vst.msk [vmem:[#allocation2 + $0x20] sm:$0xff] %vm1205, %v1118
      %1211 = vst.msk [vmem:[#allocation2 + $0x28] sm:$0xff] %vm1205, %v1120
      %1212 = vst.msk [vmem:[#allocation2 + $0x30] sm:$0xff] %vm1205, %v1122
      %1213 = vst.msk [vmem:[#allocation2 + $0x38] sm:$0xff] %vm1205, %v1124
      %1214 = vst.msk [vmem:[#allocation2 + $0x40] sm:$0xff] %vm1205, %v1126
      %1215 = vst.msk [vmem:[#allocation2 + $0x48] sm:$0xff] %vm1205, %v1128
      %1216 = vst.msk [vmem:[#allocation2 + $0x50] sm:$0xff] %vm1205, %v1130
      %1217 = vst.msk [vmem:[#allocation2 + $0x58] sm:$0xff] %vm1205, %v1132
      %1218 = vst.msk [vmem:[#allocation2 + $0x60] sm:$0xff] %vm1205, %v1134
      %1219 = vst.msk [vmem:[#allocation2 + $0x68] sm:$0xff] %vm1205, %v1136
      %1220 = vst.msk [vmem:[#allocation2 + $0x70] sm:$0xff] %vm1205, %v1138
      %1221 = vst.msk [vmem:[#allocation2 + $0x78] sm:$0xff] %vm1205, %v1140
      %1222 = vst.msk [vmem:[#allocation2 + $0x80] sm:$0xff] %vm1205, %v1142
      %1223 = vst.msk [vmem:[#allocation2 + $0x88] sm:$0xff] %vm1205, %v1144
      %1224 = vst.msk [vmem:[#allocation2 + $0x90] sm:$0xff] %vm1205, %v1146
      %1225 = vst.msk [vmem:[#allocation2 + $0x98] sm:$0xff] %vm1205, %v1148
      %1226 = vst.msk [vmem:[#allocation2 + $0xa0] sm:$0xff] %vm1205, %v1150
      %1227 = vst.msk [vmem:[#allocation2 + $0xa8] sm:$0xff] %vm1205, %v1152
      %1228 = vst.msk [vmem:[#allocation2 + $0xb0] sm:$0xff] %vm1205, %v1154
      %1229 = vst.msk [vmem:[#allocation2 + $0xb8] sm:$0xff] %vm1205, %v1156
      %1230 = vst.msk [vmem:[#allocation2 + $0xc0] sm:$0xff] %vm1205, %v1158
      %1231 = vst.msk [vmem:[#allocation2 + $0xc8] sm:$0xff] %vm1205, %v1160
      %1232 = vst.msk [vmem:[#allocation2 + $0xd0] sm:$0xff] %vm1205, %v1162
      %1233 = vst.msk [vmem:[#allocation2 + $0xd8] sm:$0xff] %vm1205, %v1164
      %1234 = vst.msk [vmem:[#allocation2 + $0xe0] sm:$0xff] %vm1205, %v1166
      %1235 = vst.msk [vmem:[#allocation2 + $0xe8] sm:$0xff] %vm1205, %v1168
      %1236 = vst.msk [vmem:[#allocation2 + $0xf0] sm:$0xff] %vm1205, %v1170
      %1237 = vst.msk [vmem:[#allocation2 + $0xf8] sm:$0xff] %vm1205, %v1172
      %v1238 = vsel %vm650, %v198, 0.0
      %v1239 = vsel %vm651, %v199, 0.0
      %v1240 = vsel %vm652, %v200, 0.0
      %v1241 = vsel %vm653, %v201, 0.0
      %v1242 = vsel %vm654, %v202, 0.0
      %v1243 = vsel %vm655, %v203, 0.0
      %v1244 = vsel %vm656, %v204, 0.0
      %v1245 = vsel %vm657, %v205, 0.0
      %v1246 = vsel %vm658, %v206, 0.0
      %v1247 = vsel %vm659, %v207, 0.0
      %v1248 = vsel %vm660, %v208, 0.0
      %v1249 = vsel %vm661, %v209, 0.0
      %v1250 = vsel %vm662, %v210, 0.0
      %v1251 = vsel %vm663, %v211, 0.0
      %v1252 = vsel %vm664, %v212, 0.0
      %v1253 = vsel %vm665, %v213, 0.0
      %v1254 = vsel %vm666, %v214, 0.0
      %v1255 = vsel %vm667, %v215, 0.0
      %v1256 = vsel %vm668, %v216, 0.0
      %v1257 = vsel %vm669, %v217, 0.0
      %v1258 = vsel %vm670, %v218, 0.0
      %v1259 = vsel %vm671, %v219, 0.0
      %v1260 = vsel %vm672, %v220, 0.0
      %v1261 = vsel %vm673, %v221, 0.0
      %v1262 = vsel %vm674, %v222, 0.0
      %v1263 = vsel %vm675, %v223, 0.0
      %v1264 = vsel %vm676, %v224, 0.0
      %v1265 = vsel %vm677, %v225, 0.0
      %v1266 = vsel %vm678, %v226, 0.0
      %v1267 = vsel %vm679, %v227, 0.0
      %v1268 = vsel %vm680, %v228, 0.0
      %v1269 = vsel %vm681, %v229, 0.0
      %1302 = vrot.lane.b32.xlu0 %v1238, 12
      %v1303 = vpop.permute.xlu0 %1302
      %1304 = vrot.lane.b32.xlu0 %v1239, 12
      %v1305 = vpop.permute.xlu0 %1304
      %1306 = vrot.lane.b32.xlu0 %v1240, 12
      %v1307 = vpop.permute.xlu0 %1306
      %1308 = vrot.lane.b32.xlu0 %v1241, 12
      %v1309 = vpop.permute.xlu0 %1308
      %1310 = vrot.lane.b32.xlu0 %v1242, 12
      %v1311 = vpop.permute.xlu0 %1310
      %1312 = vrot.lane.b32.xlu0 %v1243, 12
      %v1313 = vpop.permute.xlu0 %1312
      %1314 = vrot.lane.b32.xlu0 %v1244, 12
      %v1315 = vpop.permute.xlu0 %1314
      %1316 = vrot.lane.b32.xlu0 %v1245, 12
      %v1317 = vpop.permute.xlu0 %1316
      %1318 = vrot.lane.b32.xlu0 %v1246, 12
      %v1319 = vpop.permute.xlu0 %1318
      %1320 = vrot.lane.b32.xlu0 %v1247, 12
      %v1321 = vpop.permute.xlu0 %1320
      %1322 = vrot.lane.b32.xlu0 %v1248, 12
      %v1323 = vpop.permute.xlu0 %1322
      %1324 = vrot.lane.b32.xlu0 %v1249, 12
      %v1325 = vpop.permute.xlu0 %1324
      %1326 = vrot.lane.b32.xlu0 %v1250, 12
      %v1327 = vpop.permute.xlu0 %1326
      %1328 = vrot.lane.b32.xlu0 %v1251, 12
      %v1329 = vpop.permute.xlu0 %1328
      %1330 = vrot.lane.b32.xlu0 %v1252, 12
      %v1331 = vpop.permute.xlu0 %1330
      %1332 = vrot.lane.b32.xlu0 %v1253, 12
      %v1333 = vpop.permute.xlu0 %1332
      %1334 = vrot.lane.b32.xlu0 %v1254, 12
      %v1335 = vpop.permute.xlu0 %1334
      %1336 = vrot.lane.b32.xlu0 %v1255, 12
      %v1337 = vpop.permute.xlu0 %1336
      %1338 = vrot.lane.b32.xlu0 %v1256, 12
      %v1339 = vpop.permute.xlu0 %1338
      %1340 = vrot.lane.b32.xlu0 %v1257, 12
      %v1341 = vpop.permute.xlu0 %1340
      %1342 = vrot.lane.b32.xlu0 %v1258, 12
      %v1343 = vpop.permute.xlu0 %1342
      %1344 = vrot.lane.b32.xlu0 %v1259, 12
      %v1345 = vpop.permute.xlu0 %1344
      %1346 = vrot.lane.b32.xlu0 %v1260, 12
      %v1347 = vpop.permute.xlu0 %1346
      %1348 = vrot.lane.b32.xlu0 %v1261, 12
      %v1349 = vpop.permute.xlu0 %1348
      %1350 = vrot.lane.b32.xlu0 %v1262, 12
      %v1351 = vpop.permute.xlu0 %1350
      %1352 = vrot.lane.b32.xlu0 %v1263, 12
      %v1353 = vpop.permute.xlu0 %1352
      %1354 = vrot.lane.b32.xlu0 %v1264, 12
      %v1355 = vpop.permute.xlu0 %1354
      %1356 = vrot.lane.b32.xlu0 %v1265, 12
      %v1357 = vpop.permute.xlu0 %1356
      %1358 = vrot.lane.b32.xlu0 %v1266, 12
      %v1359 = vpop.permute.xlu0 %1358
      %1360 = vrot.lane.b32.xlu0 %v1267, 12
      %v1361 = vpop.permute.xlu0 %1360
      %1362 = vrot.lane.b32.xlu0 %v1268, 12
      %v1363 = vpop.permute.xlu0 %1362
      %1364 = vrot.lane.b32.xlu0 %v1269, 12
      %v1365 = vpop.permute.xlu0 %1364
      %vm1398 = vcmask 130144
      %1399 = vst.msk [vmem:[#allocation2] sm:$0xff] %vm1398, %v1303
      %1400 = vst.msk [vmem:[#allocation2 + $0x8] sm:$0xff] %vm1398, %v1305
      %1401 = vst.msk [vmem:[#allocation2 + $0x10] sm:$0xff] %vm1398, %v1307
      %1402 = vst.msk [vmem:[#allocation2 + $0x18] sm:$0xff] %vm1398, %v1309
      %1403 = vst.msk [vmem:[#allocation2 + $0x20] sm:$0xff] %vm1398, %v1311
      %1404 = vst.msk [vmem:[#allocation2 + $0x28] sm:$0xff] %vm1398, %v1313
      %1405 = vst.msk [vmem:[#allocation2 + $0x30] sm:$0xff] %vm1398, %v1315
      %1406 = vst.msk [vmem:[#allocation2 + $0x38] sm:$0xff] %vm1398, %v1317
      %1407 = vst.msk [vmem:[#allocation2 + $0x40] sm:$0xff] %vm1398, %v1319
      %1408 = vst.msk [vmem:[#allocation2 + $0x48] sm:$0xff] %vm1398, %v1321
      %1409 = vst.msk [vmem:[#allocation2 + $0x50] sm:$0xff] %vm1398, %v1323
      %1410 = vst.msk [vmem:[#allocation2 + $0x58] sm:$0xff] %vm1398, %v1325
      %1411 = vst.msk [vmem:[#allocation2 + $0x60] sm:$0xff] %vm1398, %v1327
      %1412 = vst.msk [vmem:[#allocation2 + $0x68] sm:$0xff] %vm1398, %v1329
      %1413 = vst.msk [vmem:[#allocation2 + $0x70] sm:$0xff] %vm1398, %v1331
      %1414 = vst.msk [vmem:[#allocation2 + $0x78] sm:$0xff] %vm1398, %v1333
      %1415 = vst.msk [vmem:[#allocation2 + $0x80] sm:$0xff] %vm1398, %v1335
      %1416 = vst.msk [vmem:[#allocation2 + $0x88] sm:$0xff] %vm1398, %v1337
      %1417 = vst.msk [vmem:[#allocation2 + $0x90] sm:$0xff] %vm1398, %v1339
      %1418 = vst.msk [vmem:[#allocation2 + $0x98] sm:$0xff] %vm1398, %v1341
      %1419 = vst.msk [vmem:[#allocation2 + $0xa0] sm:$0xff] %vm1398, %v1343
      %1420 = vst.msk [vmem:[#allocation2 + $0xa8] sm:$0xff] %vm1398, %v1345
      %1421 = vst.msk [vmem:[#allocation2 + $0xb0] sm:$0xff] %vm1398, %v1347
      %1422 = vst.msk [vmem:[#allocation2 + $0xb8] sm:$0xff] %vm1398, %v1349
      %1423 = vst.msk [vmem:[#allocation2 + $0xc0] sm:$0xff] %vm1398, %v1351
      %1424 = vst.msk [vmem:[#allocation2 + $0xc8] sm:$0xff] %vm1398, %v1353
      %1425 = vst.msk [vmem:[#allocation2 + $0xd0] sm:$0xff] %vm1398, %v1355
      %1426 = vst.msk [vmem:[#allocation2 + $0xd8] sm:$0xff] %vm1398, %v1357
      %1427 = vst.msk [vmem:[#allocation2 + $0xe0] sm:$0xff] %vm1398, %v1359
      %1428 = vst.msk [vmem:[#allocation2 + $0xe8] sm:$0xff] %vm1398, %v1361
      %1429 = vst.msk [vmem:[#allocation2 + $0xf0] sm:$0xff] %vm1398, %v1363
      %1430 = vst.msk [vmem:[#allocation2 + $0xf8] sm:$0xff] %vm1398, %v1365
      %1433 = vrot.lane.b32.xlu0 %v198, 16
      %v1434 = vpop.permute.xlu0 %1433
      %1435 = vrot.lane.b32.xlu0 %v199, 16
      %v1436 = vpop.permute.xlu0 %1435
      %1437 = vrot.lane.b32.xlu0 %v200, 16
      %v1438 = vpop.permute.xlu0 %1437
      %1439 = vrot.lane.b32.xlu0 %v201, 16
      %v1440 = vpop.permute.xlu0 %1439
      %1441 = vrot.lane.b32.xlu0 %v202, 16
      %v1442 = vpop.permute.xlu0 %1441
      %1443 = vrot.lane.b32.xlu0 %v203, 16
      %v1444 = vpop.permute.xlu0 %1443
      %1445 = vrot.lane.b32.xlu0 %v204, 16
      %v1446 = vpop.permute.xlu0 %1445
      %1447 = vrot.lane.b32.xlu0 %v205, 16
      %v1448 = vpop.permute.xlu0 %1447
      %1449 = vrot.lane.b32.xlu0 %v206, 16
      %v1450 = vpop.permute.xlu0 %1449
      %1451 = vrot.lane.b32.xlu0 %v207, 16
      %v1452 = vpop.permute.xlu0 %1451
      %1453 = vrot.lane.b32.xlu0 %v208, 16
      %v1454 = vpop.permute.xlu0 %1453
      %1455 = vrot.lane.b32.xlu0 %v209, 16
      %v1456 = vpop.permute.xlu0 %1455
      %1457 = vrot.lane.b32.xlu0 %v210, 16
      %v1458 = vpop.permute.xlu0 %1457
      %1459 = vrot.lane.b32.xlu0 %v211, 16
      %v1460 = vpop.permute.xlu0 %1459
      %1461 = vrot.lane.b32.xlu0 %v212, 16
      %v1462 = vpop.permute.xlu0 %1461
      %1463 = vrot.lane.b32.xlu0 %v213, 16
      %v1464 = vpop.permute.xlu0 %1463
      %1465 = vrot.lane.b32.xlu0 %v214, 16
      %v1466 = vpop.permute.xlu0 %1465
      %1467 = vrot.lane.b32.xlu0 %v215, 16
      %v1468 = vpop.permute.xlu0 %1467
      %1469 = vrot.lane.b32.xlu0 %v216, 16
      %v1470 = vpop.permute.xlu0 %1469
      %1471 = vrot.lane.b32.xlu0 %v217, 16
      %v1472 = vpop.permute.xlu0 %1471
      %1473 = vrot.lane.b32.xlu0 %v218, 16
      %v1474 = vpop.permute.xlu0 %1473
      %1475 = vrot.lane.b32.xlu0 %v219, 16
      %v1476 = vpop.permute.xlu0 %1475
      %1477 = vrot.lane.b32.xlu0 %v220, 16
      %v1478 = vpop.permute.xlu0 %1477
      %1479 = vrot.lane.b32.xlu0 %v221, 16
      %v1480 = vpop.permute.xlu0 %1479
      %1481 = vrot.lane.b32.xlu0 %v222, 16
      %v1482 = vpop.permute.xlu0 %1481
      %1483 = vrot.lane.b32.xlu0 %v223, 16
      %v1484 = vpop.permute.xlu0 %1483
      %1485 = vrot.lane.b32.xlu0 %v224, 16
      %v1486 = vpop.permute.xlu0 %1485
      %1487 = vrot.lane.b32.xlu0 %v225, 16
      %v1488 = vpop.permute.xlu0 %1487
      %1489 = vrot.lane.b32.xlu0 %v226, 16
      %v1490 = vpop.permute.xlu0 %1489
      %1491 = vrot.lane.b32.xlu0 %v227, 16
      %v1492 = vpop.permute.xlu0 %1491
      %1493 = vrot.lane.b32.xlu0 %v228, 16
      %v1494 = vpop.permute.xlu0 %1493
      %1495 = vrot.lane.b32.xlu0 %v229, 16
      %v1496 = vpop.permute.xlu0 %1495
      %1497 = vrot.lane.b32.xlu0 %v230, 16
      %v1498 = vpop.permute.xlu0 %1497
      %vm1532 = vcmask 162945
      %1533 = vst.msk [vmem:[#allocation2 - $0x1] sm:$0xfe] %vm1532, %v1434
      %vm1534 = vcmask 162944
      %1535 = vst.msk [vmem:[#allocation2 + $0x7] sm:$0xff] %vm1534, %v1436
      %1536 = vst.msk [vmem:[#allocation2 + $0xf] sm:$0xff] %vm1534, %v1438
      %1537 = vst.msk [vmem:[#allocation2 + $0x17] sm:$0xff] %vm1534, %v1440
      %1538 = vst.msk [vmem:[#allocation2 + $0x1f] sm:$0xff] %vm1534, %v1442
      %1539 = vst.msk [vmem:[#allocation2 + $0x27] sm:$0xff] %vm1534, %v1444
      %1540 = vst.msk [vmem:[#allocation2 + $0x2f] sm:$0xff] %vm1534, %v1446
      %1541 = vst.msk [vmem:[#allocation2 + $0x37] sm:$0xff] %vm1534, %v1448
      %1542 = vst.msk [vmem:[#allocation2 + $0x3f] sm:$0xff] %vm1534, %v1450
      %1543 = vst.msk [vmem:[#allocation2 + $0x47] sm:$0xff] %vm1534, %v1452
      %1544 = vst.msk [vmem:[#allocation2 + $0x4f] sm:$0xff] %vm1534, %v1454
      %1545 = vst.msk [vmem:[#allocation2 + $0x57] sm:$0xff] %vm1534, %v1456
      %1546 = vst.msk [vmem:[#allocation2 + $0x5f] sm:$0xff] %vm1534, %v1458
      %1547 = vst.msk [vmem:[#allocation2 + $0x67] sm:$0xff] %vm1534, %v1460
      %1548 = vst.msk [vmem:[#allocation2 + $0x6f] sm:$0xff] %vm1534, %v1462
      %1549 = vst.msk [vmem:[#allocation2 + $0x77] sm:$0xff] %vm1534, %v1464
      %1550 = vst.msk [vmem:[#allocation2 + $0x7f] sm:$0xff] %vm1534, %v1466
      %1551 = vst.msk [vmem:[#allocation2 + $0x87] sm:$0xff] %vm1534, %v1468
      %1552 = vst.msk [vmem:[#allocation2 + $0x8f] sm:$0xff] %vm1534, %v1470
      %1553 = vst.msk [vmem:[#allocation2 + $0x97] sm:$0xff] %vm1534, %v1472
      %1554 = vst.msk [vmem:[#allocation2 + $0x9f] sm:$0xff] %vm1534, %v1474
      %1555 = vst.msk [vmem:[#allocation2 + $0xa7] sm:$0xff] %vm1534, %v1476
      %1556 = vst.msk [vmem:[#allocation2 + $0xaf] sm:$0xff] %vm1534, %v1478
      %1557 = vst.msk [vmem:[#allocation2 + $0xb7] sm:$0xff] %vm1534, %v1480
      %1558 = vst.msk [vmem:[#allocation2 + $0xbf] sm:$0xff] %vm1534, %v1482
      %1559 = vst.msk [vmem:[#allocation2 + $0xc7] sm:$0xff] %vm1534, %v1484
      %1560 = vst.msk [vmem:[#allocation2 + $0xcf] sm:$0xff] %vm1534, %v1486
      %1561 = vst.msk [vmem:[#allocation2 + $0xd7] sm:$0xff] %vm1534, %v1488
      %1562 = vst.msk [vmem:[#allocation2 + $0xdf] sm:$0xff] %vm1534, %v1490
      %1563 = vst.msk [vmem:[#allocation2 + $0xe7] sm:$0xff] %vm1534, %v1492
      %1564 = vst.msk [vmem:[#allocation2 + $0xef] sm:$0xff] %vm1534, %v1494
      %1565 = vst.msk [vmem:[#allocation2 + $0xf7] sm:$0xff] %vm1534, %v1496
      %vm1566 = vcmask 155776
      %1567 = vst.msk [vmem:[#allocation2 + $0xff] sm:$0x1] %vm1566, %v1498
      %v1568 = vrot.slane %v229, 2
      %v1569 = vsel %vm947, %v1011, %v1568
      %v1570 = vrot.slane %v230, 2
      %v1571 = vsel %vm947, %v1568, %v1570
      %v1574 = vsel %vm682, %v954, 0.0
      %v1575 = vsel %vm683, %v956, 0.0
      %v1576 = vsel %vm684, %v958, 0.0
      %v1577 = vsel %vm685, %v960, 0.0
      %v1578 = vsel %vm686, %v962, 0.0
      %v1579 = vsel %vm687, %v964, 0.0
      %v1580 = vsel %vm688, %v966, 0.0
      %v1581 = vsel %vm689, %v968, 0.0
      %v1582 = vsel %vm690, %v970, 0.0
      %v1583 = vsel %vm691, %v972, 0.0
      %v1584 = vsel %vm692, %v974, 0.0
      %v1585 = vsel %vm693, %v976, 0.0
      %v1586 = vsel %vm694, %v978, 0.0
      %v1587 = vsel %vm695, %v980, 0.0
      %v1588 = vsel %vm696, %v982, 0.0
      %v1589 = vsel %vm697, %v984, 0.0
      %v1590 = vsel %vm698, %v986, 0.0
      %v1591 = vsel %vm699, %v988, 0.0
      %v1592 = vsel %vm700, %v990, 0.0
      %v1593 = vsel %vm701, %v992, 0.0
      %v1594 = vsel %vm702, %v994, 0.0
      %v1595 = vsel %vm703, %v996, 0.0
      %v1596 = vsel %vm704, %v998, 0.0
      %v1597 = vsel %vm705, %v1000, 0.0
      %v1598 = vsel %vm706, %v1002, 0.0
      %v1599 = vsel %vm707, %v1004, 0.0
      %v1600 = vsel %vm708, %v1006, 0.0
      %v1601 = vsel %vm709, %v1008, 0.0
      %v1602 = vsel %vm710, %v1010, 0.0
      %v1603 = vsel %vm711, %v1012, 0.0
      %v1604 = vsel %vm712, %v1569, 0.0
      %v1605 = vsel %vm713, %v1571, 0.0
      %1638 = vrot.lane.b32.xlu0 %v1574, 20
      %v1639 = vpop.permute.xlu0 %1638
      %1640 = vrot.lane.b32.xlu0 %v1575, 20
      %v1641 = vpop.permute.xlu0 %1640
      %1642 = vrot.lane.b32.xlu0 %v1576, 20
      %v1643 = vpop.permute.xlu0 %1642
      %1644 = vrot.lane.b32.xlu0 %v1577, 20
      %v1645 = vpop.permute.xlu0 %1644
      %1646 = vrot.lane.b32.xlu0 %v1578, 20
      %v1647 = vpop.permute.xlu0 %1646
      %1648 = vrot.lane.b32.xlu0 %v1579, 20
      %v1649 = vpop.permute.xlu0 %1648
      %1650 = vrot.lane.b32.xlu0 %v1580, 20
      %v1651 = vpop.permute.xlu0 %1650
      %1652 = vrot.lane.b32.xlu0 %v1581, 20
      %v1653 = vpop.permute.xlu0 %1652
      %1654 = vrot.lane.b32.xlu0 %v1582, 20
      %v1655 = vpop.permute.xlu0 %1654
      %1656 = vrot.lane.b32.xlu0 %v1583, 20
      %v1657 = vpop.permute.xlu0 %1656
      %1658 = vrot.lane.b32.xlu0 %v1584, 20
      %v1659 = vpop.permute.xlu0 %1658
      %1660 = vrot.lane.b32.xlu0 %v1585, 20
      %v1661 = vpop.permute.xlu0 %1660
      %1662 = vrot.lane.b32.xlu0 %v1586, 20
      %v1663 = vpop.permute.xlu0 %1662
      %1664 = vrot.lane.b32.xlu0 %v1587, 20
      %v1665 = vpop.permute.xlu0 %1664
      %1666 = vrot.lane.b32.xlu0 %v1588, 20
      %v1667 = vpop.permute.xlu0 %1666
      %1668 = vrot.lane.b32.xlu0 %v1589, 20
      %v1669 = vpop.permute.xlu0 %1668
      %1670 = vrot.lane.b32.xlu0 %v1590, 20
      %v1671 = vpop.permute.xlu0 %1670
      %1672 = vrot.lane.b32.xlu0 %v1591, 20
      %v1673 = vpop.permute.xlu0 %1672
      %1674 = vrot.lane.b32.xlu0 %v1592, 20
      %v1675 = vpop.permute.xlu0 %1674
      %1676 = vrot.lane.b32.xlu0 %v1593, 20
      %v1677 = vpop.permute.xlu0 %1676
      %1678 = vrot.lane.b32.xlu0 %v1594, 20
      %v1679 = vpop.permute.xlu0 %1678
      %1680 = vrot.lane.b32.xlu0 %v1595, 20
      %v1681 = vpop.permute.xlu0 %1680
      %1682 = vrot.lane.b32.xlu0 %v1596, 20
      %v1683 = vpop.permute.xlu0 %1682
      %1684 = vrot.lane.b32.xlu0 %v1597, 20
      %v1685 = vpop.permute.xlu0 %1684
      %1686 = vrot.lane.b32.xlu0 %v1598, 20
      %v1687 = vpop.permute.xlu0 %1686
      %1688 = vrot.lane.b32.xlu0 %v1599, 20
      %v1689 = vpop.permute.xlu0 %1688
      %1690 = vrot.lane.b32.xlu0 %v1600, 20
      %v1691 = vpop.permute.xlu0 %1690
      %1692 = vrot.lane.b32.xlu0 %v1601, 20
      %v1693 = vpop.permute.xlu0 %1692
      %1694 = vrot.lane.b32.xlu0 %v1602, 20
      %v1695 = vpop.permute.xlu0 %1694
      %1696 = vrot.lane.b32.xlu0 %v1603, 20
      %v1697 = vpop.permute.xlu0 %1696
      %1698 = vrot.lane.b32.xlu0 %v1604, 20
      %v1699 = vpop.permute.xlu0 %1698
      %1700 = vrot.lane.b32.xlu0 %v1605, 20
      %v1701 = vpop.permute.xlu0 %1700
      %vm1734 = vcmask 195744
      %1735 = vst.msk [vmem:[#allocation2] sm:$0xff] %vm1734, %v1639
      %1736 = vst.msk [vmem:[#allocation2 + $0x8] sm:$0xff] %vm1734, %v1641
      %1737 = vst.msk [vmem:[#allocation2 + $0x10] sm:$0xff] %vm1734, %v1643
      %1738 = vst.msk [vmem:[#allocation2 + $0x18] sm:$0xff] %vm1734, %v1645
      %1739 = vst.msk [vmem:[#allocation2 + $0x20] sm:$0xff] %vm1734, %v1647
      %1740 = vst.msk [vmem:[#allocation2 + $0x28] sm:$0xff] %vm1734, %v1649
      %1741 = vst.msk [vmem:[#allocation2 + $0x30] sm:$0xff] %vm1734, %v1651
      %1742 = vst.msk [vmem:[#allocation2 + $0x38] sm:$0xff] %vm1734, %v1653
      %1743 = vst.msk [vmem:[#allocation2 + $0x40] sm:$0xff] %vm1734, %v1655
      %1744 = vst.msk [vmem:[#allocation2 + $0x48] sm:$0xff] %vm1734, %v1657
      %1745 = vst.msk [vmem:[#allocation2 + $0x50] sm:$0xff] %vm1734, %v1659
      %1746 = vst.msk [vmem:[#allocation2 + $0x58] sm:$0xff] %vm1734, %v1661
      %1747 = vst.msk [vmem:[#allocation2 + $0x60] sm:$0xff] %vm1734, %v1663
      %1748 = vst.msk [vmem:[#allocation2 + $0x68] sm:$0xff] %vm1734, %v1665
      %1749 = vst.msk [vmem:[#allocation2 + $0x70] sm:$0xff] %vm1734, %v1667
      %1750 = vst.msk [vmem:[#allocation2 + $0x78] sm:$0xff] %vm1734, %v1669
      %1751 = vst.msk [vmem:[#allocation2 + $0x80] sm:$0xff] %vm1734, %v1671
      %1752 = vst.msk [vmem:[#allocation2 + $0x88] sm:$0xff] %vm1734, %v1673
      %1753 = vst.msk [vmem:[#allocation2 + $0x90] sm:$0xff] %vm1734, %v1675
      %1754 = vst.msk [vmem:[#allocation2 + $0x98] sm:$0xff] %vm1734, %v1677
      %1755 = vst.msk [vmem:[#allocation2 + $0xa0] sm:$0xff] %vm1734, %v1679
      %1756 = vst.msk [vmem:[#allocation2 + $0xa8] sm:$0xff] %vm1734, %v1681
      %1757 = vst.msk [vmem:[#allocation2 + $0xb0] sm:$0xff] %vm1734, %v1683
      %1758 = vst.msk [vmem:[#allocation2 + $0xb8] sm:$0xff] %vm1734, %v1685
      %1759 = vst.msk [vmem:[#allocation2 + $0xc0] sm:$0xff] %vm1734, %v1687
      %1760 = vst.msk [vmem:[#allocation2 + $0xc8] sm:$0xff] %vm1734, %v1689
      %1761 = vst.msk [vmem:[#allocation2 + $0xd0] sm:$0xff] %vm1734, %v1691
      %1762 = vst.msk [vmem:[#allocation2 + $0xd8] sm:$0xff] %vm1734, %v1693
      %1763 = vst.msk [vmem:[#allocation2 + $0xe0] sm:$0xff] %vm1734, %v1695
      %1764 = vst.msk [vmem:[#allocation2 + $0xe8] sm:$0xff] %vm1734, %v1697
      %1765 = vst.msk [vmem:[#allocation2 + $0xf0] sm:$0xff] %vm1734, %v1699
      %1766 = vst.msk [vmem:[#allocation2 + $0xf8] sm:$0xff] %vm1734, %v1701
      %v1767 = vsel %vm650, %v200, 0.0
      %v1768 = vsel %vm651, %v201, 0.0
      %v1769 = vsel %vm652, %v202, 0.0
      %v1770 = vsel %vm653, %v203, 0.0
      %v1771 = vsel %vm654, %v204, 0.0
      %v1772 = vsel %vm655, %v205, 0.0
      %v1773 = vsel %vm656, %v206, 0.0
      %v1774 = vsel %vm657, %v207, 0.0
      %v1775 = vsel %vm658, %v208, 0.0
      %v1776 = vsel %vm659, %v209, 0.0
      %v1777 = vsel %vm660, %v210, 0.0
      %v1778 = vsel %vm661, %v211, 0.0
      %v1779 = vsel %vm662, %v212, 0.0
      %v1780 = vsel %vm663, %v213, 0.0
      %v1781 = vsel %vm664, %v214, 0.0
      %v1782 = vsel %vm665, %v215, 0.0
      %v1783 = vsel %vm666, %v216, 0.0
      %v1784 = vsel %vm667, %v217, 0.0
      %v1785 = vsel %vm668, %v218, 0.0
      %v1786 = vsel %vm669, %v219, 0.0
      %v1787 = vsel %vm670, %v220, 0.0
      %v1788 = vsel %vm671, %v221, 0.0
      %v1789 = vsel %vm672, %v222, 0.0
      %v1790 = vsel %vm673, %v223, 0.0
      %v1791 = vsel %vm674, %v224, 0.0
      %v1792 = vsel %vm675, %v225, 0.0
      %v1793 = vsel %vm676, %v226, 0.0
      %v1794 = vsel %vm677, %v227, 0.0
      %v1795 = vsel %vm678, %v228, 0.0
      %v1796 = vsel %vm679, %v229, 0.0
      %v1797 = vsel %vm680, %v230, 0.0
      %v1798 = vsel %vm681, %v231, 0.0
      %1831 = vrot.lane.b32.xlu0 %v1767, 24
      %v1832 = vpop.permute.xlu0 %1831
      %1833 = vrot.lane.b32.xlu0 %v1768, 24
      %v1834 = vpop.permute.xlu0 %1833
      %1835 = vrot.lane.b32.xlu0 %v1769, 24
      %v1836 = vpop.permute.xlu0 %1835
      %1837 = vrot.lane.b32.xlu0 %v1770, 24
      %v1838 = vpop.permute.xlu0 %1837
      %1839 = vrot.lane.b32.xlu0 %v1771, 24
      %v1840 = vpop.permute.xlu0 %1839
      %1841 = vrot.lane.b32.xlu0 %v1772, 24
      %v1842 = vpop.permute.xlu0 %1841
      %1843 = vrot.lane.b32.xlu0 %v1773, 24
      %v1844 = vpop.permute.xlu0 %1843
      %1845 = vrot.lane.b32.xlu0 %v1774, 24
      %v1846 = vpop.permute.xlu0 %1845
      %1847 = vrot.lane.b32.xlu0 %v1775, 24
      %v1848 = vpop.permute.xlu0 %1847
      %1849 = vrot.lane.b32.xlu0 %v1776, 24
      %v1850 = vpop.permute.xlu0 %1849
      %1851 = vrot.lane.b32.xlu0 %v1777, 24
      %v1852 = vpop.permute.xlu0 %1851
      %1853 = vrot.lane.b32.xlu0 %v1778, 24
      %v1854 = vpop.permute.xlu0 %1853
      %1855 = vrot.lane.b32.xlu0 %v1779, 24
      %v1856 = vpop.permute.xlu0 %1855
      %1857 = vrot.lane.b32.xlu0 %v1780, 24
      %v1858 = vpop.permute.xlu0 %1857
      %1859 = vrot.lane.b32.xlu0 %v1781, 24
      %v1860 = vpop.permute.xlu0 %1859
      %1861 = vrot.lane.b32.xlu0 %v1782, 24
      %v1862 = vpop.permute.xlu0 %1861
      %1863 = vrot.lane.b32.xlu0 %v1783, 24
      %v1864 = vpop.permute.xlu0 %1863
      %1865 = vrot.lane.b32.xlu0 %v1784, 24
      %v1866 = vpop.permute.xlu0 %1865
      %1867 = vrot.lane.b32.xlu0 %v1785, 24
      %v1868 = vpop.permute.xlu0 %1867
      %1869 = vrot.lane.b32.xlu0 %v1786, 24
      %v1870 = vpop.permute.xlu0 %1869
      %1871 = vrot.lane.b32.xlu0 %v1787, 24
      %v1872 = vpop.permute.xlu0 %1871
      %1873 = vrot.lane.b32.xlu0 %v1788, 24
      %v1874 = vpop.permute.xlu0 %1873
      %1875 = vrot.lane.b32.xlu0 %v1789, 24
      %v1876 = vpop.permute.xlu0 %1875
      %1877 = vrot.lane.b32.xlu0 %v1790, 24
      %v1878 = vpop.permute.xlu0 %1877
      %1879 = vrot.lane.b32.xlu0 %v1791, 24
      %v1880 = vpop.permute.xlu0 %1879
      %1881 = vrot.lane.b32.xlu0 %v1792, 24
      %v1882 = vpop.permute.xlu0 %1881
      %1883 = vrot.lane.b32.xlu0 %v1793, 24
      %v1884 = vpop.permute.xlu0 %1883
      %1885 = vrot.lane.b32.xlu0 %v1794, 24
      %v1886 = vpop.permute.xlu0 %1885
      %1887 = vrot.lane.b32.xlu0 %v1795, 24
      %v1888 = vpop.permute.xlu0 %1887
      %1889 = vrot.lane.b32.xlu0 %v1796, 24
      %v1890 = vpop.permute.xlu0 %1889
      %1891 = vrot.lane.b32.xlu0 %v1797, 24
      %v1892 = vpop.permute.xlu0 %1891
      %1893 = vrot.lane.b32.xlu0 %v1798, 24
      %v1894 = vpop.permute.xlu0 %1893
      %vm1927 = vcmask 228544
      %1928 = vst.msk [vmem:[#allocation2] sm:$0xff] %vm1927, %v1832
      %1929 = vst.msk [vmem:[#allocation2 + $0x8] sm:$0xff] %vm1927, %v1834
      %1930 = vst.msk [vmem:[#allocation2 + $0x10] sm:$0xff] %vm1927, %v1836
      %1931 = vst.msk [vmem:[#allocation2 + $0x18] sm:$0xff] %vm1927, %v1838
      %1932 = vst.msk [vmem:[#allocation2 + $0x20] sm:$0xff] %vm1927, %v1840
      %1933 = vst.msk [vmem:[#allocation2 + $0x28] sm:$0xff] %vm1927, %v1842
      %1934 = vst.msk [vmem:[#allocation2 + $0x30] sm:$0xff] %vm1927, %v1844
      %1935 = vst.msk [vmem:[#allocation2 + $0x38] sm:$0xff] %vm1927, %v1846
      %1936 = vst.msk [vmem:[#allocation2 + $0x40] sm:$0xff] %vm1927, %v1848
      %1937 = vst.msk [vmem:[#allocation2 + $0x48] sm:$0xff] %vm1927, %v1850
      %1938 = vst.msk [vmem:[#allocation2 + $0x50] sm:$0xff] %vm1927, %v1852
      %1939 = vst.msk [vmem:[#allocation2 + $0x58] sm:$0xff] %vm1927, %v1854
      %1940 = vst.msk [vmem:[#allocation2 + $0x60] sm:$0xff] %vm1927, %v1856
      %1941 = vst.msk [vmem:[#allocation2 + $0x68] sm:$0xff] %vm1927, %v1858
      %1942 = vst.msk [vmem:[#allocation2 + $0x70] sm:$0xff] %vm1927, %v1860
      %1943 = vst.msk [vmem:[#allocation2 + $0x78] sm:$0xff] %vm1927, %v1862
      %1944 = vst.msk [vmem:[#allocation2 + $0x80] sm:$0xff] %vm1927, %v1864
      %1945 = vst.msk [vmem:[#allocation2 + $0x88] sm:$0xff] %vm1927, %v1866
      %1946 = vst.msk [vmem:[#allocation2 + $0x90] sm:$0xff] %vm1927, %v1868
      %1947 = vst.msk [vmem:[#allocation2 + $0x98] sm:$0xff] %vm1927, %v1870
      %1948 = vst.msk [vmem:[#allocation2 + $0xa0] sm:$0xff] %vm1927, %v1872
      %1949 = vst.msk [vmem:[#allocation2 + $0xa8] sm:$0xff] %vm1927, %v1874
      %1950 = vst.msk [vmem:[#allocation2 + $0xb0] sm:$0xff] %vm1927, %v1876
      %1951 = vst.msk [vmem:[#allocation2 + $0xb8] sm:$0xff] %vm1927, %v1878
      %1952 = vst.msk [vmem:[#allocation2 + $0xc0] sm:$0xff] %vm1927, %v1880
      %1953 = vst.msk [vmem:[#allocation2 + $0xc8] sm:$0xff] %vm1927, %v1882
      %1954 = vst.msk [vmem:[#allocation2 + $0xd0] sm:$0xff] %vm1927, %v1884
      %1955 = vst.msk [vmem:[#allocation2 + $0xd8] sm:$0xff] %vm1927, %v1886
      %1956 = vst.msk [vmem:[#allocation2 + $0xe0] sm:$0xff] %vm1927, %v1888
      %1957 = vst.msk [vmem:[#allocation2 + $0xe8] sm:$0xff] %vm1927, %v1890
      %1958 = vst.msk [vmem:[#allocation2 + $0xf0] sm:$0xff] %vm1927, %v1892
      %1959 = vst.msk [vmem:[#allocation2 + $0xf8] sm:$0xff] %vm1927, %v1894
      %1962 = vrot.lane.b32.xlu0 %v200, 28
      %v1963 = vpop.permute.xlu0 %1962
      %1964 = vrot.lane.b32.xlu0 %v201, 28
      %v1965 = vpop.permute.xlu0 %1964
      %1966 = vrot.lane.b32.xlu0 %v202, 28
      %v1967 = vpop.permute.xlu0 %1966
      %1968 = vrot.lane.b32.xlu0 %v203, 28
      %v1969 = vpop.permute.xlu0 %1968
      %1970 = vrot.lane.b32.xlu0 %v204, 28
      %v1971 = vpop.permute.xlu0 %1970
      %1972 = vrot.lane.b32.xlu0 %v205, 28
      %v1973 = vpop.permute.xlu0 %1972
      %1974 = vrot.lane.b32.xlu0 %v206, 28
      %v1975 = vpop.permute.xlu0 %1974
      %1976 = vrot.lane.b32.xlu0 %v207, 28
      %v1977 = vpop.permute.xlu0 %1976
      %1978 = vrot.lane.b32.xlu0 %v208, 28
      %v1979 = vpop.permute.xlu0 %1978
      %1980 = vrot.lane.b32.xlu0 %v209, 28
      %v1981 = vpop.permute.xlu0 %1980
      %1982 = vrot.lane.b32.xlu0 %v210, 28
      %v1983 = vpop.permute.xlu0 %1982
      %1984 = vrot.lane.b32.xlu0 %v211, 28
      %v1985 = vpop.permute.xlu0 %1984
      %1986 = vrot.lane.b32.xlu0 %v212, 28
      %v1987 = vpop.permute.xlu0 %1986
      %1988 = vrot.lane.b32.xlu0 %v213, 28
      %v1989 = vpop.permute.xlu0 %1988
      %1990 = vrot.lane.b32.xlu0 %v214, 28
      %v1991 = vpop.permute.xlu0 %1990
      %1992 = vrot.lane.b32.xlu0 %v215, 28
      %v1993 = vpop.permute.xlu0 %1992
      %1994 = vrot.lane.b32.xlu0 %v216, 28
      %v1995 = vpop.permute.xlu0 %1994
      %1996 = vrot.lane.b32.xlu0 %v217, 28
      %v1997 = vpop.permute.xlu0 %1996
      %1998 = vrot.lane.b32.xlu0 %v218, 28
      %v1999 = vpop.permute.xlu0 %1998
      %2000 = vrot.lane.b32.xlu0 %v219, 28
      %v2001 = vpop.permute.xlu0 %2000
      %2002 = vrot.lane.b32.xlu0 %v220, 28
      %v2003 = vpop.permute.xlu0 %2002
      %2004 = vrot.lane.b32.xlu0 %v221, 28
      %v2005 = vpop.permute.xlu0 %2004
      %2006 = vrot.lane.b32.xlu0 %v222, 28
      %v2007 = vpop.permute.xlu0 %2006
      %2008 = vrot.lane.b32.xlu0 %v223, 28
      %v2009 = vpop.permute.xlu0 %2008
      %2010 = vrot.lane.b32.xlu0 %v224, 28
      %v2011 = vpop.permute.xlu0 %2010
      %2012 = vrot.lane.b32.xlu0 %v225, 28
      %v2013 = vpop.permute.xlu0 %2012
      %2014 = vrot.lane.b32.xlu0 %v226, 28
      %v2015 = vpop.permute.xlu0 %2014
      %2016 = vrot.lane.b32.xlu0 %v227, 28
      %v2017 = vpop.permute.xlu0 %2016
      %2018 = vrot.lane.b32.xlu0 %v228, 28
      %v2019 = vpop.permute.xlu0 %2018
      %2020 = vrot.lane.b32.xlu0 %v229, 28
      %v2021 = vpop.permute.xlu0 %2020
      %2022 = vrot.lane.b32.xlu0 %v230, 28
      %v2023 = vpop.permute.xlu0 %2022
      %2024 = vrot.lane.b32.xlu0 %v231, 28
      %v2025 = vpop.permute.xlu0 %2024
      %2026 = vrot.lane.b32.xlu0 %v232, 28
      %v2027 = vpop.permute.xlu0 %2026
      %vm2061 = vcmask 261345
      %2062 = vst.msk [vmem:[#allocation2 - $0x1] sm:$0xfe] %vm2061, %v1963
      %vm2063 = vcmask 261344
      %2064 = vst.msk [vmem:[#allocation2 + $0x7] sm:$0xff] %vm2063, %v1965
      %2065 = vst.msk [vmem:[#allocation2 + $0xf] sm:$0xff] %vm2063, %v1967
      %2066 = vst.msk [vmem:[#allocation2 + $0x17] sm:$0xff] %vm2063, %v1969
      %2067 = vst.msk [vmem:[#allocation2 + $0x1f] sm:$0xff] %vm2063, %v1971
      %2068 = vst.msk [vmem:[#allocation2 + $0x27] sm:$0xff] %vm2063, %v1973
      %2069 = vst.msk [vmem:[#allocation2 + $0x2f] sm:$0xff] %vm2063, %v1975
      %2070 = vst.msk [vmem:[#allocation2 + $0x37] sm:$0xff] %vm2063, %v1977
      %2071 = vst.msk [vmem:[#allocation2 + $0x3f] sm:$0xff] %vm2063, %v1979
      %2072 = vst.msk [vmem:[#allocation2 + $0x47] sm:$0xff] %vm2063, %v1981
      %2073 = vst.msk [vmem:[#allocation2 + $0x4f] sm:$0xff] %vm2063, %v1983
      %2074 = vst.msk [vmem:[#allocation2 + $0x57] sm:$0xff] %vm2063, %v1985
      %2075 = vst.msk [vmem:[#allocation2 + $0x5f] sm:$0xff] %vm2063, %v1987
      %2076 = vst.msk [vmem:[#allocation2 + $0x67] sm:$0xff] %vm2063, %v1989
      %2077 = vst.msk [vmem:[#allocation2 + $0x6f] sm:$0xff] %vm2063, %v1991
      %2078 = vst.msk [vmem:[#allocation2 + $0x77] sm:$0xff] %vm2063, %v1993
      %2079 = vst.msk [vmem:[#allocation2 + $0x7f] sm:$0xff] %vm2063, %v1995
      %2080 = vst.msk [vmem:[#allocation2 + $0x87] sm:$0xff] %vm2063, %v1997
      %2081 = vst.msk [vmem:[#allocation2 + $0x8f] sm:$0xff] %vm2063, %v1999
      %2082 = vst.msk [vmem:[#allocation2 + $0x97] sm:$0xff] %vm2063, %v2001
      %2083 = vst.msk [vmem:[#allocation2 + $0x9f] sm:$0xff] %vm2063, %v2003
      %2084 = vst.msk [vmem:[#allocation2 + $0xa7] sm:$0xff] %vm2063, %v2005
      %2085 = vst.msk [vmem:[#allocation2 + $0xaf] sm:$0xff] %vm2063, %v2007
      %2086 = vst.msk [vmem:[#allocation2 + $0xb7] sm:$0xff] %vm2063, %v2009
      %2087 = vst.msk [vmem:[#allocation2 + $0xbf] sm:$0xff] %vm2063, %v2011
      %2088 = vst.msk [vmem:[#allocation2 + $0xc7] sm:$0xff] %vm2063, %v2013
      %2089 = vst.msk [vmem:[#allocation2 + $0xcf] sm:$0xff] %vm2063, %v2015
      %2090 = vst.msk [vmem:[#allocation2 + $0xd7] sm:$0xff] %vm2063, %v2017
      %2091 = vst.msk [vmem:[#allocation2 + $0xdf] sm:$0xff] %vm2063, %v2019
      %2092 = vst.msk [vmem:[#allocation2 + $0xe7] sm:$0xff] %vm2063, %v2021
      %2093 = vst.msk [vmem:[#allocation2 + $0xef] sm:$0xff] %vm2063, %v2023
      %2094 = vst.msk [vmem:[#allocation2 + $0xf7] sm:$0xff] %vm2063, %v2025
      %vm2095 = vcmask 254176
      %2096 = vst.msk [vmem:[#allocation2 + $0xff] sm:$0x1] %vm2095, %v2027
      %v2097 = vrot.slane %v231, 2
      %v2098 = vsel %vm947, %v1570, %v2097
      %v2099 = vrot.slane %v232, 2
      %v2100 = vsel %vm947, %v2097, %v2099
      %v2103 = vsel %vm682, %v958, 0.0
      %v2104 = vsel %vm683, %v960, 0.0
      %v2105 = vsel %vm684, %v962, 0.0
      %v2106 = vsel %vm685, %v964, 0.0
      %v2107 = vsel %vm686, %v966, 0.0
      %v2108 = vsel %vm687, %v968, 0.0
      %v2109 = vsel %vm688, %v970, 0.0
      %v2110 = vsel %vm689, %v972, 0.0
      %v2111 = vsel %vm690, %v974, 0.0
      %v2112 = vsel %vm691, %v976, 0.0
      %v2113 = vsel %vm692, %v978, 0.0
      %v2114 = vsel %vm693, %v980, 0.0
      %v2115 = vsel %vm694, %v982, 0.0
      %v2116 = vsel %vm695, %v984, 0.0
      %v2117 = vsel %vm696, %v986, 0.0
      %v2118 = vsel %vm697, %v988, 0.0
      %v2119 = vsel %vm698, %v990, 0.0
      %v2120 = vsel %vm699, %v992, 0.0
      %v2121 = vsel %vm700, %v994, 0.0
      %v2122 = vsel %vm701, %v996, 0.0
      %v2123 = vsel %vm702, %v998, 0.0
      %v2124 = vsel %vm703, %v1000, 0.0
      %v2125 = vsel %vm704, %v1002, 0.0
      %v2126 = vsel %vm705, %v1004, 0.0
      %v2127 = vsel %vm706, %v1006, 0.0
      %v2128 = vsel %vm707, %v1008, 0.0
      %v2129 = vsel %vm708, %v1010, 0.0
      %v2130 = vsel %vm709, %v1012, 0.0
      %v2131 = vsel %vm710, %v1569, 0.0
      %v2132 = vsel %vm711, %v1571, 0.0
      %v2133 = vsel %vm712, %v2098, 0.0
      %v2134 = vsel %vm713, %v2100, 0.0
      %2167 = vrot.lane.b32.xlu0 %v2103, 32
      %v2168 = vpop.permute.xlu0 %2167
      %2169 = vrot.lane.b32.xlu0 %v2104, 32
      %v2170 = vpop.permute.xlu0 %2169
      %2171 = vrot.lane.b32.xlu0 %v2105, 32
      %v2172 = vpop.permute.xlu0 %2171
      %2173 = vrot.lane.b32.xlu0 %v2106, 32
      %v2174 = vpop.permute.xlu0 %2173
      %2175 = vrot.lane.b32.xlu0 %v2107, 32
      %v2176 = vpop.permute.xlu0 %2175
      %2177 = vrot.lane.b32.xlu0 %v2108, 32
      %v2178 = vpop.permute.xlu0 %2177
      %2179 = vrot.lane.b32.xlu0 %v2109, 32
      %v2180 = vpop.permute.xlu0 %2179
      %2181 = vrot.lane.b32.xlu0 %v2110, 32
      %v2182 = vpop.permute.xlu0 %2181
      %2183 = vrot.lane.b32.xlu0 %v2111, 32
      %v2184 = vpop.permute.xlu0 %2183
      %2185 = vrot.lane.b32.xlu0 %v2112, 32
      %v2186 = vpop.permute.xlu0 %2185
      %2187 = vrot.lane.b32.xlu0 %v2113, 32
      %v2188 = vpop.permute.xlu0 %2187
      %2189 = vrot.lane.b32.xlu0 %v2114, 32
      %v2190 = vpop.permute.xlu0 %2189
      %2191 = vrot.lane.b32.xlu0 %v2115, 32
      %v2192 = vpop.permute.xlu0 %2191
      %2193 = vrot.lane.b32.xlu0 %v2116, 32
      %v2194 = vpop.permute.xlu0 %2193
      %2195 = vrot.lane.b32.xlu0 %v2117, 32
      %v2196 = vpop.permute.xlu0 %2195
      %2197 = vrot.lane.b32.xlu0 %v2118, 32
      %v2198 = vpop.permute.xlu0 %2197
      %2199 = vrot.lane.b32.xlu0 %v2119, 32
      %v2200 = vpop.permute.xlu0 %2199
      %2201 = vrot.lane.b32.xlu0 %v2120, 32
      %v2202 = vpop.permute.xlu0 %2201
      %2203 = vrot.lane.b32.xlu0 %v2121, 32
      %v2204 = vpop.permute.xlu0 %2203
      %2205 = vrot.lane.b32.xlu0 %v2122, 32
      %v2206 = vpop.permute.xlu0 %2205
      %2207 = vrot.lane.b32.xlu0 %v2123, 32
      %v2208 = vpop.permute.xlu0 %2207
      %2209 = vrot.lane.b32.xlu0 %v2124, 32
      %v2210 = vpop.permute.xlu0 %2209
      %2211 = vrot.lane.b32.xlu0 %v2125, 32
      %v2212 = vpop.permute.xlu0 %2211
      %2213 = vrot.lane.b32.xlu0 %v2126, 32
      %v2214 = vpop.permute.xlu0 %2213
      %2215 = vrot.lane.b32.xlu0 %v2127, 32
      %v2216 = vpop.permute.xlu0 %2215
      %2217 = vrot.lane.b32.xlu0 %v2128, 32
      %v2218 = vpop.permute.xlu0 %2217
      %2219 = vrot.lane.b32.xlu0 %v2129, 32
      %v2220 = vpop.permute.xlu0 %2219
      %2221 = vrot.lane.b32.xlu0 %v2130, 32
      %v2222 = vpop.permute.xlu0 %2221
      %2223 = vrot.lane.b32.xlu0 %v2131, 32
      %v2224 = vpop.permute.xlu0 %2223
      %2225 = vrot.lane.b32.xlu0 %v2132, 32
      %v2226 = vpop.permute.xlu0 %2225
      %2227 = vrot.lane.b32.xlu0 %v2133, 32
      %v2228 = vpop.permute.xlu0 %2227
      %2229 = vrot.lane.b32.xlu0 %v2134, 32
      %v2230 = vpop.permute.xlu0 %2229
      %vm2263 = vcmask 294144
      %2264 = vst.msk [vmem:[#allocation2] sm:$0xff] %vm2263, %v2168
      %2265 = vst.msk [vmem:[#allocation2 + $0x8] sm:$0xff] %vm2263, %v2170
      %2266 = vst.msk [vmem:[#allocation2 + $0x10] sm:$0xff] %vm2263, %v2172
      %2267 = vst.msk [vmem:[#allocation2 + $0x18] sm:$0xff] %vm2263, %v2174
      %2268 = vst.msk [vmem:[#allocation2 + $0x20] sm:$0xff] %vm2263, %v2176
      %2269 = vst.msk [vmem:[#allocation2 + $0x28] sm:$0xff] %vm2263, %v2178
      %2270 = vst.msk [vmem:[#allocation2 + $0x30] sm:$0xff] %vm2263, %v2180
      %2271 = vst.msk [vmem:[#allocation2 + $0x38] sm:$0xff] %vm2263, %v2182
      %2272 = vst.msk [vmem:[#allocation2 + $0x40] sm:$0xff] %vm2263, %v2184
      %2273 = vst.msk [vmem:[#allocation2 + $0x48] sm:$0xff] %vm2263, %v2186
      %2274 = vst.msk [vmem:[#allocation2 + $0x50] sm:$0xff] %vm2263, %v2188
      %2275 = vst.msk [vmem:[#allocation2 + $0x58] sm:$0xff] %vm2263, %v2190
      %2276 = vst.msk [vmem:[#allocation2 + $0x60] sm:$0xff] %vm2263, %v2192
      %2277 = vst.msk [vmem:[#allocation2 + $0x68] sm:$0xff] %vm2263, %v2194
      %2278 = vst.msk [vmem:[#allocation2 + $0x70] sm:$0xff] %vm2263, %v2196
      %2279 = vst.msk [vmem:[#allocation2 + $0x78] sm:$0xff] %vm2263, %v2198
      %2280 = vst.msk [vmem:[#allocation2 + $0x80] sm:$0xff] %vm2263, %v2200
      %2281 = vst.msk [vmem:[#allocation2 + $0x88] sm:$0xff] %vm2263, %v2202
      %2282 = vst.msk [vmem:[#allocation2 + $0x90] sm:$0xff] %vm2263, %v2204
      %2283 = vst.msk [vmem:[#allocation2 + $0x98] sm:$0xff] %vm2263, %v2206
      %2284 = vst.msk [vmem:[#allocation2 + $0xa0] sm:$0xff] %vm2263, %v2208
      %2285 = vst.msk [vmem:[#allocation2 + $0xa8] sm:$0xff] %vm2263, %v2210
      %2286 = vst.msk [vmem:[#allocation2 + $0xb0] sm:$0xff] %vm2263, %v2212
      %2287 = vst.msk [vmem:[#allocation2 + $0xb8] sm:$0xff] %vm2263, %v2214
      %2288 = vst.msk [vmem:[#allocation2 + $0xc0] sm:$0xff] %vm2263, %v2216
      %2289 = vst.msk [vmem:[#allocation2 + $0xc8] sm:$0xff] %vm2263, %v2218
      %2290 = vst.msk [vmem:[#allocation2 + $0xd0] sm:$0xff] %vm2263, %v2220
      %2291 = vst.msk [vmem:[#allocation2 + $0xd8] sm:$0xff] %vm2263, %v2222
      %2292 = vst.msk [vmem:[#allocation2 + $0xe0] sm:$0xff] %vm2263, %v2224
      %2293 = vst.msk [vmem:[#allocation2 + $0xe8] sm:$0xff] %vm2263, %v2226
      %2294 = vst.msk [vmem:[#allocation2 + $0xf0] sm:$0xff] %vm2263, %v2228
      %2295 = vst.msk [vmem:[#allocation2 + $0xf8] sm:$0xff] %vm2263, %v2230
      %v2296 = vld [vmem:[#allocation2] sm:$0xff]
      %v2297 = vld [vmem:[#allocation2 + $0x8] sm:$0xff]
      %v2298 = vld [vmem:[#allocation2 + $0x10] sm:$0xff]
      %v2299 = vld [vmem:[#allocation2 + $0x18] sm:$0xff]
      %v2300 = vld [vmem:[#allocation2 + $0x20] sm:$0xff]
      %v2301 = vld [vmem:[#allocation2 + $0x28] sm:$0xff]
      %v2302 = vld [vmem:[#allocation2 + $0x30] sm:$0xff]
      %v2303 = vld [vmem:[#allocation2 + $0x38] sm:$0xff]
      %v2304 = vld [vmem:[#allocation2 + $0x40] sm:$0xff]
      %v2305 = vld [vmem:[#allocation2 + $0x48] sm:$0xff]
      %v2306 = vld [vmem:[#allocation2 + $0x50] sm:$0xff]
      %v2307 = vld [vmem:[#allocation2 + $0x58] sm:$0xff]
      %v2308 = vld [vmem:[#allocation2 + $0x60] sm:$0xff]
      %v2309 = vld [vmem:[#allocation2 + $0x68] sm:$0xff]
      %v2310 = vld [vmem:[#allocation2 + $0x70] sm:$0xff]
      %v2311 = vld [vmem:[#allocation2 + $0x78] sm:$0xff]
      %v2312 = vld [vmem:[#allocation2 + $0x80] sm:$0xff]
      %v2313 = vld [vmem:[#allocation2 + $0x88] sm:$0xff]
      %v2314 = vld [vmem:[#allocation2 + $0x90] sm:$0xff]
      %v2315 = vld [vmem:[#allocation2 + $0x98] sm:$0xff]
      %v2316 = vld [vmem:[#allocation2 + $0xa0] sm:$0xff]
      %v2317 = vld [vmem:[#allocation2 + $0xa8] sm:$0xff]
      %v2318 = vld [vmem:[#allocation2 + $0xb0] sm:$0xff]
      %v2319 = vld [vmem:[#allocation2 + $0xb8] sm:$0xff]
      %v2320 = vld [vmem:[#allocation2 + $0xc0] sm:$0xff]
      %v2321 = vld [vmem:[#allocation2 + $0xc8] sm:$0xff]
      %v2322 = vld [vmem:[#allocation2 + $0xd0] sm:$0xff]
      %v2323 = vld [vmem:[#allocation2 + $0xd8] sm:$0xff]
      %v2324 = vld [vmem:[#allocation2 + $0xe0] sm:$0xff]
      %v2325 = vld [vmem:[#allocation2 + $0xe8] sm:$0xff]
      %v2326 = vld [vmem:[#allocation2 + $0xf0] sm:$0xff]
      %v2327 = vld [vmem:[#allocation2 + $0xf8] sm:$0xff]
      %v2328 = vld [vmem:[%s1] sm:$0xff]
      %v2329 = vld [vmem:[%s1 + $0x8] sm:$0xff]
      %v2330 = vld [vmem:[%s1 + $0x10] sm:$0xff]
      %v2331 = vld [vmem:[%s1 + $0x18] sm:$0xff]
      %v2332 = vld [vmem:[%s1 + $0x20] sm:$0xf]
      %v2333 = vld [vmem:[%s2] sm:$0x1]
      %v2335 = vlaneseq
      %v2336 = vshrl.u32 %v2335, 7
      %v2337 = vsub.s32 0, %v2336
      %v2338 = vrot.slane %v2333, %v2337
      %vm2340 = vcmask 293888
      %v2342 = vsel %vm2340, %v2296, 0
      %v2345 = vsel %vm2340, %v2297, 0
      %v2348 = vsel %vm2340, %v2298, 0
      %v2351 = vsel %vm2340, %v2299, 0
      %v2354 = vsel %vm2340, %v2300, 0
      %v2357 = vsel %vm2340, %v2301, 0
      %v2360 = vsel %vm2340, %v2302, 0
      %v2363 = vsel %vm2340, %v2303, 0
      %v2366 = vsel %vm2340, %v2304, 0
      %v2369 = vsel %vm2340, %v2305, 0
      %v2372 = vsel %vm2340, %v2306, 0
      %v2375 = vsel %vm2340, %v2307, 0
      %v2378 = vsel %vm2340, %v2308, 0
      %v2381 = vsel %vm2340, %v2309, 0
      %v2384 = vsel %vm2340, %v2310, 0
      %v2387 = vsel %vm2340, %v2311, 0
      %v2390 = vsel %vm2340, %v2312, 0
      %v2393 = vsel %vm2340, %v2313, 0
      %v2396 = vsel %vm2340, %v2314, 0
      %v2399 = vsel %vm2340, %v2315, 0
      %v2402 = vsel %vm2340, %v2316, 0
      %v2405 = vsel %vm2340, %v2317, 0
      %v2408 = vsel %vm2340, %v2318, 0
      %v2411 = vsel %vm2340, %v2319, 0
      %v2414 = vsel %vm2340, %v2320, 0
      %v2417 = vsel %vm2340, %v2321, 0
      %v2420 = vsel %vm2340, %v2322, 0
      %v2423 = vsel %vm2340, %v2323, 0
      %v2426 = vsel %vm2340, %v2324, 0
      %v2429 = vsel %vm2340, %v2325, 0
      %v2432 = vsel %vm2340, %v2326, 0
      %v2435 = vsel %vm2340, %v2327, 0
      %vm2437 = vcmask 1043456
      %v2439 = vsel %vm2437, %v2332, 0
      %2441 = vmatprep.subr.mxu0 0.0
      %2442 = vmatpush1.msra.mxu0 %v2328
      %2443 = vmatprep.subr.mxu0 0.0
      %2444 = vmatpush1.msra.mxu0 %v2329
      %2445 = vmatprep.subr.mxu0 0.0
      %2446 = vmatpush1.msra.mxu0 %v2330
      %2447 = vmatprep.subr.mxu0 0.0
      %2448 = vmatpush1.msra.mxu0 %v2331
      %2449 = vmatprep.subr.mxu0 0.0
      %2450 = vmatpush1.msra.mxu0 %v2439
      %2451 = vmatprep.subr.mxu0 0.0
      %2452 = vmatpush1.msra.mxu0 0.0
      %2453 = vmatprep.subr.mxu0 0.0
      %2454 = vmatpush1.msra.mxu0 0.0
      %2455 = vmatprep.subr.mxu0 0.0
      %2456 = vmatpush1.msra.mxu0 0.0
      %2457 = vmatprep.subr.mxu0 0.0
      %2458 = vmatpush1.msra.mxu0 0.0
      %2459 = vmatprep.subr.mxu0 0.0
      %2460 = vmatpush1.msra.mxu0 0.0
      %2461 = vmatprep.subr.mxu0 0.0
      %2462 = vmatpush1.msra.mxu0 0.0
      %2463 = vmatprep.subr.mxu0 0.0
      %2464 = vmatpush1.msra.mxu0 0.0
      %2465 = vmatprep.subr.mxu0 0.0
      %2466 = vmatpush1.msra.mxu0 0.0
      %2467 = vmatprep.subr.mxu0 0.0
      %2468 = vmatpush1.msra.mxu0 0.0
      %2469 = vmatprep.subr.mxu0 0.0
      %2470 = vmatpush1.msra.mxu0 0.0
      %2471 = vmatprep.subr.mxu0 0.0
      %2472 = vmatpush1.msra.mxu0 0.0
      %2473 = vmatprep.subr.mxu0 0.0
      %2474 = vmatpush1.msra.mxu0 0.0
      %2475 = vmatprep.subr.mxu0 0.0
      %2476 = vmatpush1.msra.mxu0 0.0
      %2477 = vmatprep.subr.mxu0 0.0
      %2478 = vmatpush1.msra.mxu0 0.0
      %2479 = vmatprep.subr.mxu0 0.0
      %2480 = vmatpush1.msra.mxu0 0.0
      %2481 = vmatprep.subr.mxu0 0.0
      %2482 = vmatpush1.msra.mxu0 0.0
      %2483 = vmatprep.subr.mxu0 0.0
      %2484 = vmatpush1.msra.mxu0 0.0
      %2485 = vmatprep.subr.mxu0 0.0
      %2486 = vmatpush1.msra.mxu0 0.0
      %2487 = vmatprep.subr.mxu0 0.0
      %2488 = vmatpush1.msra.mxu0 0.0
      %2489 = vmatprep.subr.mxu0 0.0
      %2490 = vmatpush1.msra.mxu0 0.0
      %2491 = vmatprep.subr.mxu0 0.0
      %2492 = vmatpush1.msra.mxu0 0.0
      %2493 = vmatprep.subr.mxu0 0.0
      %2494 = vmatpush1.msra.mxu0 0.0
      %2495 = vmatprep.subr.mxu0 0.0
      %2496 = vmatpush1.msra.mxu0 0.0
      %2497 = vmatprep.subr.mxu0 0.0
      %2498 = vmatpush1.msra.mxu0 0.0
      %2499 = vmatprep.subr.mxu0 0.0
      %2500 = vmatpush1.msra.mxu0 0.0
      %2501 = vmatprep.subr.mxu0 0.0
      %2502 = vmatpush1.msra.mxu0 0.0
      %2503 = vmatprep.subr.mxu0 0.0
      %2504 = vmatpush1.msra.mxu0 0.0
      %2505 = vmatprep.mubr.f32.mxu0 0.0
      %2506 = vmatmul.mubr.f32.gmra.mrb[0].mxu0 %v2342
      %v2507 = vpop.f32.mrb[0].mxu0
      %v2508 = vadd.f32 %v2338, %v2507
      %v2509 = vpop.f32.mrb[0].mxu0
      %2510 = vmatprep.mubr.f32.mxu0 0.0
      %2511 = vmatmul.mubr.f32.gmra.mrb[0].mxu0 %v2345
      %v2512 = vpop.f32.mrb[0].mxu0
      %v2513 = vadd.f32 %v2338, %v2512
      %v2514 = vpop.f32.mrb[0].mxu0
      %2515 = vmatprep.mubr.f32.mxu0 0.0
      %2516 = vmatmul.mubr.f32.gmra.mrb[0].mxu0 %v2348
      %v2517 = vpop.f32.mrb[0].mxu0
      %v2518 = vadd.f32 %v2338, %v2517
      %v2519 = vpop.f32.mrb[0].mxu0
      %2520 = vmatprep.mubr.f32.mxu0 0.0
      %2521 = vmatmul.mubr.f32.gmra.mrb[0].mxu0 %v2351
      %v2522 = vpop.f32.mrb[0].mxu0
      %v2523 = vadd.f32 %v2338, %v2522
      %v2524 = vpop.f32.mrb[0].mxu0
      %2525 = vmatprep.mubr.f32.mxu0 0.0
      %2526 = vmatmul.mubr.f32.gmra.mrb[0].mxu0 %v2354
      %v2527 = vpop.f32.mrb[0].mxu0
      %v2528 = vadd.f32 %v2338, %v2527
      %v2529 = vpop.f32.mrb[0].mxu0
      %2530 = vmatprep.mubr.f32.mxu0 0.0
      %2531 = vmatmul.mubr.f32.gmra.mrb[0].mxu0 %v2357
      %v2532 = vpop.f32.mrb[0].mxu0
      %v2533 = vadd.f32 %v2338, %v2532
      %v2534 = vpop.f32.mrb[0].mxu0
      %2535 = vmatprep.mubr.f32.mxu0 0.0
      %2536 = vmatmul.mubr.f32.gmra.mrb[0].mxu0 %v2360
      %v2537 = vpop.f32.mrb[0].mxu0
      %v2538 = vadd.f32 %v2338, %v2537
      %v2539 = vpop.f32.mrb[0].mxu0
      %2540 = vmatprep.mubr.f32.mxu0 0.0
      %2541 = vmatmul.mubr.f32.gmra.mrb[0].mxu0 %v2363
      %v2542 = vpop.f32.mrb[0].mxu0
      %v2543 = vadd.f32 %v2338, %v2542
      %v2544 = vpop.f32.mrb[0].mxu0
      %2545 = vmatprep.mubr.f32.mxu0 0.0
      %2546 = vmatmul.mubr.f32.gmra.mrb[0].mxu0 %v2366
      %v2547 = vpop.f32.mrb[0].mxu0
      %v2548 = vadd.f32 %v2338, %v2547
      %v2549 = vpop.f32.mrb[0].mxu0
      %2550 = vmatprep.mubr.f32.mxu0 0.0
      %2551 = vmatmul.mubr.f32.gmra.mrb[0].mxu0 %v2369
      %v2552 = vpop.f32.mrb[0].mxu0
      %v2553 = vadd.f32 %v2338, %v2552
      %v2554 = vpop.f32.mrb[0].mxu0
      %2555 = vmatprep.mubr.f32.mxu0 0.0
      %2556 = vmatmul.mubr.f32.gmra.mrb[0].mxu0 %v2372
      %v2557 = vpop.f32.mrb[0].mxu0
      %v2558 = vadd.f32 %v2338, %v2557
      %v2559 = vpop.f32.mrb[0].mxu0
      %2560 = vmatprep.mubr.f32.mxu0 0.0
      %2561 = vmatmul.mubr.f32.gmra.mrb[0].mxu0 %v2375
      %v2562 = vpop.f32.mrb[0].mxu0
      %v2563 = vadd.f32 %v2338, %v2562
      %v2564 = vpop.f32.mrb[0].mxu0
      %2565 = vmatprep.mubr.f32.mxu0 0.0
      %2566 = vmatmul.mubr.f32.gmra.mrb[0].mxu0 %v2378
      %v2567 = vpop.f32.mrb[0].mxu0
      %v2568 = vadd.f32 %v2338, %v2567
      %v2569 = vpop.f32.mrb[0].mxu0
      %2570 = vmatprep.mubr.f32.mxu0 0.0
      %2571 = vmatmul.mubr.f32.gmra.mrb[0].mxu0 %v2381
      %v2572 = vpop.f32.mrb[0].mxu0
      %v2573 = vadd.f32 %v2338, %v2572
      %v2574 = vpop.f32.mrb[0].mxu0
      %2575 = vmatprep.mubr.f32.mxu0 0.0
      %2576 = vmatmul.mubr.f32.gmra.mrb[0].mxu0 %v2384
      %v2577 = vpop.f32.mrb[0].mxu0
      %v2578 = vadd.f32 %v2338, %v2577
      %v2579 = vpop.f32.mrb[0].mxu0
      %2580 = vmatprep.mubr.f32.mxu0 0.0
      %2581 = vmatmul.mubr.f32.gmra.mrb[0].mxu0 %v2387
      %v2582 = vpop.f32.mrb[0].mxu0
      %v2583 = vadd.f32 %v2338, %v2582
      %v2584 = vpop.f32.mrb[0].mxu0
      %2585 = vmatprep.mubr.f32.mxu0 0.0
      %2586 = vmatmul.mubr.f32.gmra.mrb[0].mxu0 %v2390
      %v2587 = vpop.f32.mrb[0].mxu0
      %v2588 = vadd.f32 %v2338, %v2587
      %v2589 = vpop.f32.mrb[0].mxu0
      %2590 = vmatprep.mubr.f32.mxu0 0.0
      %2591 = vmatmul.mubr.f32.gmra.mrb[0].mxu0 %v2393
      %v2592 = vpop.f32.mrb[0].mxu0
      %v2593 = vadd.f32 %v2338, %v2592
      %v2594 = vpop.f32.mrb[0].mxu0
      %2595 = vmatprep.mubr.f32.mxu0 0.0
      %2596 = vmatmul.mubr.f32.gmra.mrb[0].mxu0 %v2396
      %v2597 = vpop.f32.mrb[0].mxu0
      %v2598 = vadd.f32 %v2338, %v2597
      %v2599 = vpop.f32.mrb[0].mxu0
      %2600 = vmatprep.mubr.f32.mxu0 0.0
      %2601 = vmatmul.mubr.f32.gmra.mrb[0].mxu0 %v2399
      %v2602 = vpop.f32.mrb[0].mxu0
      %v2603 = vadd.f32 %v2338, %v2602
      %v2604 = vpop.f32.mrb[0].mxu0
      %2605 = vmatprep.mubr.f32.mxu0 0.0
      %2606 = vmatmul.mubr.f32.gmra.mrb[0].mxu0 %v2402
      %v2607 = vpop.f32.mrb[0].mxu0
      %v2608 = vadd.f32 %v2338, %v2607
      %v2609 = vpop.f32.mrb[0].mxu0
      %2610 = vmatprep.mubr.f32.mxu0 0.0
      %2611 = vmatmul.mubr.f32.gmra.mrb[0].mxu0 %v2405
      %v2612 = vpop.f32.mrb[0].mxu0
      %v2613 = vadd.f32 %v2338, %v2612
      %v2614 = vpop.f32.mrb[0].mxu0
      %2615 = vmatprep.mubr.f32.mxu0 0.0
      %2616 = vmatmul.mubr.f32.gmra.mrb[0].mxu0 %v2408
      %v2617 = vpop.f32.mrb[0].mxu0
      %v2618 = vadd.f32 %v2338, %v2617
      %v2619 = vpop.f32.mrb[0].mxu0
      %2620 = vmatprep.mubr.f32.mxu0 0.0
      %2621 = vmatmul.mubr.f32.gmra.mrb[0].mxu0 %v2411
      %v2622 = vpop.f32.mrb[0].mxu0
      %v2623 = vadd.f32 %v2338, %v2622
      %v2624 = vpop.f32.mrb[0].mxu0
      %2625 = vmatprep.mubr.f32.mxu0 0.0
      %2626 = vmatmul.mubr.f32.gmra.mrb[0].mxu0 %v2414
      %v2627 = vpop.f32.mrb[0].mxu0
      %v2628 = vadd.f32 %v2338, %v2627
      %v2629 = vpop.f32.mrb[0].mxu0
      %2630 = vmatprep.mubr.f32.mxu0 0.0
      %2631 = vmatmul.mubr.f32.gmra.mrb[0].mxu0 %v2417
      %v2632 = vpop.f32.mrb[0].mxu0
      %v2633 = vadd.f32 %v2338, %v2632
      %v2634 = vpop.f32.mrb[0].mxu0
      %2635 = vmatprep.mubr.f32.mxu0 0.0
      %2636 = vmatmul.mubr.f32.gmra.mrb[0].mxu0 %v2420
      %v2637 = vpop.f32.mrb[0].mxu0
      %v2638 = vadd.f32 %v2338, %v2637
      %v2639 = vpop.f32.mrb[0].mxu0
      %2640 = vmatprep.mubr.f32.mxu0 0.0
      %2641 = vmatmul.mubr.f32.gmra.mrb[0].mxu0 %v2423
      %v2642 = vpop.f32.mrb[0].mxu0
      %v2643 = vadd.f32 %v2338, %v2642
      %v2644 = vpop.f32.mrb[0].mxu0
      %2645 = vmatprep.mubr.f32.mxu0 0.0
      %2646 = vmatmul.mubr.f32.gmra.mrb[0].mxu0 %v2426
      %v2647 = vpop.f32.mrb[0].mxu0
      %v2648 = vadd.f32 %v2338, %v2647
      %v2649 = vpop.f32.mrb[0].mxu0
      %2650 = vmatprep.mubr.f32.mxu0 0.0
      %2651 = vmatmul.mubr.f32.gmra.mrb[0].mxu0 %v2429
      %v2652 = vpop.f32.mrb[0].mxu0
      %v2653 = vadd.f32 %v2338, %v2652
      %v2654 = vpop.f32.mrb[0].mxu0
      %2655 = vmatprep.mubr.f32.mxu0 0.0
      %2656 = vmatmul.mubr.f32.gmra.mrb[0].mxu0 %v2432
      %v2657 = vpop.f32.mrb[0].mxu0
      %v2658 = vadd.f32 %v2338, %v2657
      %v2659 = vpop.f32.mrb[0].mxu0
      %2660 = vmatprep.mubr.f32.mxu0 0.0
      %2661 = vmatmul.mubr.f32.gmra.mrb[0].mxu0 %v2435
      %v2662 = vpop.f32.mrb[0].mxu0
      %v2663 = vadd.f32 %v2338, %v2662
      %v2664 = vpop.f32.mrb[0].mxu0
      %2665 = vdwg.mxu0
      %vm2666 = vcmask 64512
      %2667 = vst.msk [vmem:[%s192] sm:$0xff] %vm2666, %v2508
      %2668 = vst.msk [vmem:[%s192 + $0x8] sm:$0xff] %vm2666, %v2513
      %2669 = vst.msk [vmem:[%s192 + $0x10] sm:$0xff] %vm2666, %v2518
      %2670 = vst.msk [vmem:[%s192 + $0x18] sm:$0xff] %vm2666, %v2523
      %2671 = vst.msk [vmem:[%s192 + $0x20] sm:$0xff] %vm2666, %v2528
      %2672 = vst.msk [vmem:[%s192 + $0x28] sm:$0xff] %vm2666, %v2533
      %2673 = vst.msk [vmem:[%s192 + $0x30] sm:$0xff] %vm2666, %v2538
      %2674 = vst.msk [vmem:[%s192 + $0x38] sm:$0xff] %vm2666, %v2543
      %2675 = vst.msk [vmem:[%s192 + $0x40] sm:$0xff] %vm2666, %v2548
      %2676 = vst.msk [vmem:[%s192 + $0x48] sm:$0xff] %vm2666, %v2553
      %2677 = vst.msk [vmem:[%s192 + $0x50] sm:$0xff] %vm2666, %v2558
      %2678 = vst.msk [vmem:[%s192 + $0x58] sm:$0xff] %vm2666, %v2563
      %2679 = vst.msk [vmem:[%s192 + $0x60] sm:$0xff] %vm2666, %v2568
      %2680 = vst.msk [vmem:[%s192 + $0x68] sm:$0xff] %vm2666, %v2573
      %2681 = vst.msk [vmem:[%s192 + $0x70] sm:$0xff] %vm2666, %v2578
      %2682 = vst.msk [vmem:[%s192 + $0x78] sm:$0xff] %vm2666, %v2583
      %2683 = vst.msk [vmem:[%s192 + $0x80] sm:$0xff] %vm2666, %v2588
      %2684 = vst.msk [vmem:[%s192 + $0x88] sm:$0xff] %vm2666, %v2593
      %2685 = vst.msk [vmem:[%s192 + $0x90] sm:$0xff] %vm2666, %v2598
      %2686 = vst.msk [vmem:[%s192 + $0x98] sm:$0xff] %vm2666, %v2603
      %2687 = vst.msk [vmem:[%s192 + $0xa0] sm:$0xff] %vm2666, %v2608
      %2688 = vst.msk [vmem:[%s192 + $0xa8] sm:$0xff] %vm2666, %v2613
      %2689 = vst.msk [vmem:[%s192 + $0xb0] sm:$0xff] %vm2666, %v2618
      %2690 = vst.msk [vmem:[%s192 + $0xb8] sm:$0xff] %vm2666, %v2623
      %2691 = vst.msk [vmem:[%s192 + $0xc0] sm:$0xff] %vm2666, %v2628
      %2692 = vst.msk [vmem:[%s192 + $0xc8] sm:$0xff] %vm2666, %v2633
      %2693 = vst.msk [vmem:[%s192 + $0xd0] sm:$0xff] %vm2666, %v2638
      %2694 = vst.msk [vmem:[%s192 + $0xd8] sm:$0xff] %vm2666, %v2643
      %2695 = vst.msk [vmem:[%s192 + $0xe0] sm:$0xff] %vm2666, %v2648
      %2696 = vst.msk [vmem:[%s192 + $0xe8] sm:$0xff] %vm2666, %v2653
      %2697 = vst.msk [vmem:[%s192 + $0xf0] sm:$0xff] %vm2666, %v2658
      %2698 = vst.msk [vmem:[%s192 + $0xf8] sm:$0xff] %vm2666, %v2663
      %s2699 = smul.u32 32, %s19
      %p2700 = scmp.lt.s32.totalorder %s18, 1
      %s2701 = scalar_select %p2700, %s18, 1
      %p2702 = scmp.lt.s32.totalorder %s2699, 31
      %s2703 = scalar_select %p2702, %s2699, 31
      %s2704 = smul.addr %s2701, 32
      %s2705 = sadd.s32 %s2703, %s2704
      %s2706 = smul.addr %s2705, 8
      %s2707 = scalar_lea.vmem %s3, %s2706
      // Predicated region
      $region33: #{tpu_custom_call.1} parent=31 // pred_check
        %p2708 = pneg %p114
      $region34: #{tpu_custom_call.1} parent=31 // pred_check_branch
        %2710 = sbr.rel (%p2708) target = $region36
      $region35: #{tpu_custom_call.1} parent=31 // pred_region
        %s2711 = smul.u32 32, %s19
      $region36: #{tpu_custom_call.1} parent=31 // pred_fallthru
        _
    $region32: #{tpu_custom_call.1} parent=5 // pred_fallthru
      _
    %p2712 = scmp.le.s32.totalorder 2, %s9
    // Predicated region
    $region37: #{tpu_custom_call.1} parent=5 // pred_check
      %p2713 = pneg %p2712
    $region38: #{tpu_custom_call.1} parent=5 // pred_check_branch
      %2715 = sbr.rel (%p2713) target = $region40
    $region39: #{tpu_custom_call.1} parent=5 // pred_region
      %s2716 = ssub.s32 %s9, 2
      // Predicated region
      $region41: #{tpu_custom_call.1} parent=39 // pred_check
        %p2717 = pneg %p120
      $region42: #{tpu_custom_call.1} parent=39 // pred_check_branch
        %2719 = sbr.rel (%p2717) target = $region44
      $region43: #{tpu_custom_call.1} parent=39 // pred_region
        %s2720 = smul.u32 32, %s21
        %p2721 = scmp.lt.s32.totalorder %s20, 1
        %s2722 = scalar_select %p2721, %s20, 1
        %p2723 = scmp.lt.s32.totalorder %s2720, 31
        %s2724 = scalar_select %p2723, %s2720, 31
        %s2725 = smul.addr %s2722, 32
        %s2726 = sadd.s32 %s2724, %s2725
        %s2727 = smul.addr %s2726, 8
        %s2728 = scalar_lea.vmem %s3, %s2727
      $region44: #{tpu_custom_call.1} parent=39 // pred_fallthru
        _
    $region40: #{tpu_custom_call.1} parent=5 // pred_fallthru
      _
  $region6: #{tpu_custom_call.1} parent=0 // loop_footer
    %s13 = sadd.s32 1, %s9
  $region7: #{tpu_custom_call.1} parent=0 // loop_footer_branch
    %8 = sbr.rel target = $region3
  $region8: #{tpu_custom_call.1} parent=0 // loop_exit
    _

</llo_original>
